<compile_context>
chip_gen: v7x
topology: tpu7x:2x2x1
jax: 0.10.0
libtpu: 0.0.40
codegen_flags: <defaults>
</compile_context>

<pallas_src>
import functools

import jax
import jax.numpy as jnp
from jax.experimental import pallas as pl
from jax.experimental.pallas import tpu as pltpu

BN_EPS = 1e-5


# --------------------------------------------------------------------------
# Fused Pallas kernel: depthwise 3x3 (+bias+ReLU) -> pointwise 1x1 (+bias+ReLU)
# --------------------------------------------------------------------------

def _mobilev1_block_kernel(x_ref, dww_ref, dwb_ref, pww_ref, pwb_ref, o_ref,
                           *, stride, tile_h, wo):
    """One grid step == one (image, output-row-tile).

    x_ref:   (P, hh, wh, cin)  bf16 stride-phase planes of the zero-padded
                               NHWC input for the CURRENT image (resident
                               across the row-tile grid axis).
    dww_ref: (9, cin)    bf16  depthwise 3x3 weights, BN scale folded in.
    dwb_ref: (1, cin)    f32   depthwise folded-BN bias.
    pww_ref: (cin, cout) bf16  pointwise weights, BN scale folded in (MXU).
    pwb_ref: (1, cout)   f32   pointwise folded-BN bias.
    o_ref:   (tile_h*wo, cout) bf16 block output (lane-dense channel axis).
    """
    s = stride
    th = tile_h
    row0 = pl.multiple_of(pl.program_id(1) * th, th)

    w_all = dww_ref[...]                                     # (9, cin) bf16

    # ---- depthwise 3x3: 9 taps, bf16 multiplies, f32 accumulation ---------
    # Load each needed (phase, dy) slab ONCE with an aligned start (dy and the
    # row-tile offset are on the 3rd-from-minor axis), then derive the dx taps
    # by slicing the register-resident slab (sublane shift) instead of issuing
    # 9 misaligned vector loads from VMEM.
    slabs = {}
    acc = None
    for dy in range(3):                                      # static unroll
        for dx in range(3):
            p = (dy % s) * s + (dx % s)                      # phase plane
            oy, ox = dy // s, dx // s                        # unit-stride offsets
            key = (p, oy)
            if key not in slabs:
                slabs[key] = x_ref[p, pl.ds(row0 + oy, th)]  # (th, wh, cin) bf16
            tap = slabs[key][:, ox:ox + wo, :]               # (th, wo, cin) bf16
            prod = tap * w_all[dy * 3 + dx]                  # bf16 mul (VPU)
            acc = prod.astype(jnp.float32) if acc is None else acc + prod

    dw = jnp.maximum(acc + dwb_ref[...], 0.0)                # BN bias + ReLU (f32)

    # ---- pointwise 1x1 on the MXU (bf16 in, f32 accumulate) ---------------
    # NOTE: for large cin/cout (>=512) this matmul should get K/N tiling with
    # an f32 VMEM accumulator + pl.when init/finalize; unnecessary at 64x128.
    dw = dw.reshape(th * wo, x_ref.shape[-1]).astype(pww_ref.dtype)
    out = jnp.dot(dw, pww_ref[...], preferred_element_type=jnp.float32)
    out = jnp.maximum(out + pwb_ref[...], 0.0)               # BN bias + ReLU (f32)
    o_ref[...] = out.astype(o_ref.dtype)


# --------------------------------------------------------------------------
# JAX glue: padding + stride-phase decomposition + row-tile selection
# --------------------------------------------------------------------------

def _phase_planes(x_nhwc, stride):
    """Zero-pad (pad=1), split into stride*stride phase planes (every 3x3 tap
    becomes a unit-stride slice) and pad the per-plane width up to a multiple
    of 8 sublanes (dense DMA rows / VMEM tiles).  Planes are bf16."""
    N, H, W, C = x_nhwc.shape
    s = stride
    ho = (H + 2 - 3) // s + 1
    wo = (W + 2 - 3) // s + 1
    hh = ho + (3 - 1) // s          # rows a phase plane must hold: y + dy//s
    wh = wo + (3 - 1) // s          # cols a phase plane must hold: x + dx//s
    wh_pad = ((wh + 7) // 8) * 8    # sublane-dense plane width
    hp, wp = s * hh, s * wh_pad
    xp = jnp.pad(x_nhwc.astype(jnp.bfloat16),
                 ((0, 0), (1, hp - H - 1), (1, wp - W - 1), (0, 0)))
    planes = [xp[:, py::s, px::s, :] for py in range(s) for px in range(s)]
    return jnp.stack(planes, axis=1), ho, wo   # (N, s*s, hh, wh_pad, C)


def _pick_tile_h(ho, wo):
    """Output-row tile height: largest divisor of ho whose M-tile (tile_h*wo)
    is <= 128 rows, a multiple of 8 sublanes, and still leaves >= 2 row tiles
    (pipeline depth / megacore sharding); whole image as a fallback."""
    cands = [d for d in range(1, ho + 1)
             if ho % d == 0 and (d * wo) % 8 == 0
             and d * wo <= 128 and ho // d >= 2]
    return max(cands) if cands else ho


def mobilev1_block_forward(params, x_nchw, *, stride):
    """MobileV1Block forward: NCHW f32 in, NCHW bf16 out."""
    x = jnp.transpose(x_nchw, (0, 2, 3, 1))                  # NCHW -> NHWC
    planes, ho, wo = _phase_planes(x, stride)
    N, P, hh, wh_pad, cin = planes.shape
    cout = params["pw_w"].shape[1]
    th = _pick_tile_h(ho, wo)
    m_tile = th * wo

    kernel = functools.partial(_mobilev1_block_kernel,
                               stride=stride, tile_h=th, wo=wo)
    out = pl.pallas_call(
        kernel,
        out_shape=jax.ShapeDtypeStruct((N, ho * wo, cout), jnp.bfloat16),
        grid_spec=pltpu.PrefetchScalarGridSpec(
            num_scalar_prefetch=0,
            grid=(N, ho // th),                              # (image, row tile)
            in_specs=[
                # Per-image planes; index_map ignores t -> DMA'd once per image
                # and kept VMEM-resident across the row-tile axis.
                pl.BlockSpec((None, P, hh, wh_pad, cin),
                             lambda n, t: (n, 0, 0, 0, 0)),
                pl.BlockSpec((9, cin), lambda n, t: (0, 0)),
                pl.BlockSpec((1, cin), lambda n, t: (0, 0)),
                pl.BlockSpec((cin, cout), lambda n, t: (0, 0)),
                pl.BlockSpec((1, cout), lambda n, t: (0, 0)),
            ],
            out_specs=pl.BlockSpec((None, m_tile, cout), lambda n, t: (n, t, 0)),
        ),
        compiler_params=pltpu.CompilerParams(
            dimension_semantics=("parallel", "parallel"),
            vmem_limit_bytes=48 * 1024 * 1024,               # explicit (v7x: 64 MiB phys)
        ),
    )(planes, params["dw_w"], params["dw_b"], params["pw_w"], params["pw_b"])

    out = out.reshape(N, ho, wo, cout)
    return jnp.transpose(out, (0, 3, 1, 2))                  # NHWC -> NCHW (bf16)


# --------------------------------------------------------------------------
# Parameters: deterministic synthetic init, BN folded (eval-mode) into weights
# --------------------------------------------------------------------------

def _fold_bn(gamma, beta, mean, var):
    scale = gamma / jnp.sqrt(var + BN_EPS)
    return scale, beta - mean * scale


def _init_bn(key, c):
    k1, k2, k3, k4 = jax.random.split(key, 4)
    gamma = 1.0 + 0.1 * jax.random.normal(k1, (c,), jnp.float32)
    beta = 0.1 * jax.random.normal(k2, (c,), jnp.float32)
    mean = 0.1 * jax.random.normal(k3, (c,), jnp.float32)
    var = 0.5 + jax.random.uniform(k4, (c,), jnp.float32)
    return gamma, beta, mean, var


def init_block_params(key, in_planes, out_planes):
    k_dw, k_pw, k_bn1, k_bn2 = jax.random.split(key, 4)
    dw_w = jax.random.normal(k_dw, (in_planes, 1, 3, 3), jnp.float32) / 3.0
    pw_w = jax.random.normal(k_pw, (out_planes, in_planes, 1, 1), jnp.float32) \
        / jnp.sqrt(float(in_planes))
    bn1 = _init_bn(k_bn1, in_planes)
    bn2 = _init_bn(k_bn2, out_planes)

    s1, b1 = _fold_bn(*bn1)
    s2, b2 = _fold_bn(*bn2)
    dw_w9 = (dw_w.reshape(in_planes, 9) * s1[:, None]).T     # (9, Cin), BN-scaled
    pw_mat = (pw_w[:, :, 0, 0] * s2[:, None]).T              # (Cin, Cout), BN-scaled

    kernel_params = {
        "dw_w": dw_w9.astype(jnp.bfloat16),                  # bf16 VPU operand
        "dw_b": b1[None, :].astype(jnp.float32),
        "pw_w": pw_mat.astype(jnp.bfloat16),                 # bf16 MXU operand
        "pw_b": b2[None, :].astype(jnp.float32),
    }
    raw = {"dw_w": dw_w, "pw_w": pw_w, "bn1": bn1, "bn2": bn2}
    return kernel_params, raw


# --------------------------------------------------------------------------
# Pure-JAX reference (eval-mode BN, f32) for the correctness check
# --------------------------------------------------------------------------

def reference_block(raw, x_nchw, stride):
    def bn(y, g, b, m, v):
        return (y - m[None, :, None, None]) / jnp.sqrt(v[None, :, None, None] + BN_EPS) \
            * g[None, :, None, None] + b[None, :, None, None]

    cin = x_nchw.shape[1]
    y = jax.lax.conv_general_dilated(
        x_nchw, raw["dw_w"], window_strides=(stride, stride),
        padding=((1, 1), (1, 1)),
        dimension_numbers=("NCHW", "OIHW", "NCHW"), feature_group_count=cin)
    y = jnp.maximum(bn(y, *raw["bn1"]), 0.0)
    z = jax.lax.conv_general_dilated(
        y, raw["pw_w"], window_strides=(1, 1), padding="VALID",
        dimension_numbers=("NCHW", "OIHW", "NCHW"))
    return jnp.maximum(bn(z, *raw["bn2"]), 0.0)


# --------------------------------------------------------------------------

if __name__ == "__main__":
    key = jax.random.PRNGKey(0)
    kp, kx = jax.random.split(key)

    in_planes, out_planes = 64, 128
    N, H, W = 2, 16, 16

    for stride in (1, 2):                                    # both block variants
        params, raw = init_block_params(jax.random.fold_in(kp, stride),
                                        in_planes, out_planes)
        x = jax.random.normal(jax.random.fold_in(kx, stride),
                              (N, in_planes, H, W), jnp.float32)

        fwd = jax.jit(functools.partial(mobilev1_block_forward, stride=stride))
        out = jax.block_until_ready(fwd(params, x))

        ho = (H - 1) // stride + 1
        assert out.shape == (N, out_planes, ho, ho), out.shape
        assert out.dtype == jnp.bfloat16, out.dtype
        out_f32 = out.astype(jnp.float32)
        assert bool(jnp.all(jnp.isfinite(out_f32)))

        ref = reference_block(raw, x, stride)
        max_err = float(jnp.max(jnp.abs(out_f32 - ref)))
        # bf16 taps / weights / activations / output => a few 1e-2 absolute
        # error against the f32 reference; much tighter than the old 1e-1.
        assert bool(jnp.allclose(out_f32, ref, rtol=4e-2, atol=4e-2)), max_err

    print("KERNEL_OK")
</pallas_src>

<mosaic_0001>
module attributes {stable_mosaic.version = 11 : i64} {
  func.func @_mobilev1_block_kernel(%arg0: i32, %arg1: i32, %arg2: memref<1x1x18x24x64xbf16, #tpu.memory_space<vmem>>, %arg3: memref<9x64xbf16, #tpu.memory_space<vmem>>, %arg4: memref<1x64xf32, #tpu.memory_space<vmem>>, %arg5: memref<64x128xbf16, #tpu.memory_space<vmem>>, %arg6: memref<1x128xf32, #tpu.memory_space<vmem>>, %arg7: memref<1x128x128xbf16, #tpu.memory_space<vmem>>) attributes {dimension_semantics = [#tpu.dimension_semantics<parallel>, #tpu.dimension_semantics<parallel>], iteration_bounds = array<i64: 2, 2>, scalar_prefetch = 0 : i64, scratch_operands = 0 : i64, tpu.core_type = #tpu.core_type<tc>, window_params = [{transform_indices = @transform_0, window_bounds = array<i64: 1, 1, 18, 24, 64>}, {pipeline_mode = #tpu.pipeline_mode<synchronous>, transform_indices = @transform_1, window_bounds = array<i64: 9, 64>}, {pipeline_mode = #tpu.pipeline_mode<synchronous>, transform_indices = @transform_2, window_bounds = array<i64: 1, 64>}, {pipeline_mode = #tpu.pipeline_mode<synchronous>, transform_indices = @transform_3, window_bounds = array<i64: 64, 128>}, {pipeline_mode = #tpu.pipeline_mode<synchronous>, transform_indices = @transform_4, window_bounds = array<i64: 1, 128>}, {transform_indices = @transform_5, window_bounds = array<i64: 1, 128, 128>}]} {
    %c8_i32 = arith.constant 8 : i32
    %0 = arith.muli %arg1, %c8_i32 : i32
    %1 = tpu.assume_multiple %0, 8 : i32
    %c0 = arith.constant 0 : index
    %c0_0 = arith.constant 0 : index
    %2 = vector.load %arg3[%c0, %c0_0] : memref<9x64xbf16, #tpu.memory_space<vmem>>, vector<9x64xbf16>
    %c0_i32 = arith.constant 0 : i32
    %3 = arith.addi %1, %c0_i32 : i32
    %c0_1 = arith.constant 0 : index
    %c0_2 = arith.constant 0 : index
    %4 = arith.index_cast %3 : i32 to index
    %c0_3 = arith.constant 0 : index
    %c0_4 = arith.constant 0 : index
    %5 = vector.load %arg2[%c0_1, %c0_2, %4, %c0_3, %c0_4] : memref<1x1x18x24x64xbf16, #tpu.memory_space<vmem>>, vector<1x1x8x24x64xbf16>
    %6 = vector.shape_cast %5 : vector<1x1x8x24x64xbf16> to vector<8x24x64xbf16>
    %7 = vector.extract_strided_slice %6 {offsets = [0, 0, 0], sizes = [8, 16, 64], strides = [1, 1, 1]} : vector<8x24x64xbf16> to vector<8x16x64xbf16>
    %8 = vector.extract_strided_slice %2 {offsets = [0, 0], sizes = [1, 64], strides = [1, 1]} : vector<9x64xbf16> to vector<1x64xbf16>
    %9 = vector.shape_cast %8 : vector<1x64xbf16> to vector<64xbf16>
    %10 = vector.shape_cast %9 : vector<64xbf16> to vector<1x1x64xbf16>
    %11 = vector.broadcast %10 : vector<1x1x64xbf16> to vector<8x16x64xbf16>
    %12 = arith.mulf %7, %11 : vector<8x16x64xbf16>
    %13 = arith.extf %12 : vector<8x16x64xbf16> to vector<8x16x64xf32>
    %14 = vector.extract_strided_slice %6 {offsets = [0, 1, 0], sizes = [8, 16, 64], strides = [1, 1, 1]} : vector<8x24x64xbf16> to vector<8x16x64xbf16>
    %15 = vector.extract_strided_slice %2 {offsets = [1, 0], sizes = [1, 64], strides = [1, 1]} : vector<9x64xbf16> to vector<1x64xbf16>
    %16 = vector.shape_cast %15 : vector<1x64xbf16> to vector<64xbf16>
    %17 = vector.shape_cast %16 : vector<64xbf16> to vector<1x1x64xbf16>
    %18 = vector.broadcast %17 : vector<1x1x64xbf16> to vector<8x16x64xbf16>
    %19 = arith.mulf %14, %18 : vector<8x16x64xbf16>
    %20 = arith.extf %19 : vector<8x16x64xbf16> to vector<8x16x64xf32>
    %21 = arith.addf %13, %20 : vector<8x16x64xf32>
    %22 = vector.extract_strided_slice %6 {offsets = [0, 2, 0], sizes = [8, 16, 64], strides = [1, 1, 1]} : vector<8x24x64xbf16> to vector<8x16x64xbf16>
    %23 = vector.extract_strided_slice %2 {offsets = [2, 0], sizes = [1, 64], strides = [1, 1]} : vector<9x64xbf16> to vector<1x64xbf16>
    %24 = vector.shape_cast %23 : vector<1x64xbf16> to vector<64xbf16>
    %25 = vector.shape_cast %24 : vector<64xbf16> to vector<1x1x64xbf16>
    %26 = vector.broadcast %25 : vector<1x1x64xbf16> to vector<8x16x64xbf16>
    %27 = arith.mulf %22, %26 : vector<8x16x64xbf16>
    %28 = arith.extf %27 : vector<8x16x64xbf16> to vector<8x16x64xf32>
    %29 = arith.addf %21, %28 : vector<8x16x64xf32>
    %c1_i32 = arith.constant 1 : i32
    %30 = arith.addi %1, %c1_i32 : i32
    %c0_5 = arith.constant 0 : index
    %c0_6 = arith.constant 0 : index
    %31 = arith.index_cast %30 : i32 to index
    %c0_7 = arith.constant 0 : index
    %c0_8 = arith.constant 0 : index
    %32 = vector.load %arg2[%c0_5, %c0_6, %31, %c0_7, %c0_8] : memref<1x1x18x24x64xbf16, #tpu.memory_space<vmem>>, vector<1x1x8x24x64xbf16>
    %33 = vector.shape_cast %32 : vector<1x1x8x24x64xbf16> to vector<8x24x64xbf16>
    %34 = vector.extract_strided_slice %33 {offsets = [0, 0, 0], sizes = [8, 16, 64], strides = [1, 1, 1]} : vector<8x24x64xbf16> to vector<8x16x64xbf16>
    %35 = vector.extract_strided_slice %2 {offsets = [3, 0], sizes = [1, 64], strides = [1, 1]} : vector<9x64xbf16> to vector<1x64xbf16>
    %36 = vector.shape_cast %35 : vector<1x64xbf16> to vector<64xbf16>
    %37 = vector.shape_cast %36 : vector<64xbf16> to vector<1x1x64xbf16>
    %38 = vector.broadcast %37 : vector<1x1x64xbf16> to vector<8x16x64xbf16>
    %39 = arith.mulf %34, %38 : vector<8x16x64xbf16>
    %40 = arith.extf %39 : vector<8x16x64xbf16> to vector<8x16x64xf32>
    %41 = arith.addf %29, %40 : vector<8x16x64xf32>
    %42 = vector.extract_strided_slice %33 {offsets = [0, 1, 0], sizes = [8, 16, 64], strides = [1, 1, 1]} : vector<8x24x64xbf16> to vector<8x16x64xbf16>
    %43 = vector.extract_strided_slice %2 {offsets = [4, 0], sizes = [1, 64], strides = [1, 1]} : vector<9x64xbf16> to vector<1x64xbf16>
    %44 = vector.shape_cast %43 : vector<1x64xbf16> to vector<64xbf16>
    %45 = vector.shape_cast %44 : vector<64xbf16> to vector<1x1x64xbf16>
    %46 = vector.broadcast %45 : vector<1x1x64xbf16> to vector<8x16x64xbf16>
    %47 = arith.mulf %42, %46 : vector<8x16x64xbf16>
    %48 = arith.extf %47 : vector<8x16x64xbf16> to vector<8x16x64xf32>
    %49 = arith.addf %41, %48 : vector<8x16x64xf32>
    %50 = vector.extract_strided_slice %33 {offsets = [0, 2, 0], sizes = [8, 16, 64], strides = [1, 1, 1]} : vector<8x24x64xbf16> to vector<8x16x64xbf16>
    %51 = vector.extract_strided_slice %2 {offsets = [5, 0], sizes = [1, 64], strides = [1, 1]} : vector<9x64xbf16> to vector<1x64xbf16>
    %52 = vector.shape_cast %51 : vector<1x64xbf16> to vector<64xbf16>
    %53 = vector.shape_cast %52 : vector<64xbf16> to vector<1x1x64xbf16>
    %54 = vector.broadcast %53 : vector<1x1x64xbf16> to vector<8x16x64xbf16>
    %55 = arith.mulf %50, %54 : vector<8x16x64xbf16>
    %56 = arith.extf %55 : vector<8x16x64xbf16> to vector<8x16x64xf32>
    %57 = arith.addf %49, %56 : vector<8x16x64xf32>
    %c2_i32 = arith.constant 2 : i32
    %58 = arith.addi %1, %c2_i32 : i32
    %c0_9 = arith.constant 0 : index
    %c0_10 = arith.constant 0 : index
    %59 = arith.index_cast %58 : i32 to index
    %c0_11 = arith.constant 0 : index
    %c0_12 = arith.constant 0 : index
    %60 = vector.load %arg2[%c0_9, %c0_10, %59, %c0_11, %c0_12] : memref<1x1x18x24x64xbf16, #tpu.memory_space<vmem>>, vector<1x1x8x24x64xbf16>
    %61 = vector.shape_cast %60 : vector<1x1x8x24x64xbf16> to vector<8x24x64xbf16>
    %62 = vector.extract_strided_slice %61 {offsets = [0, 0, 0], sizes = [8, 16, 64], strides = [1, 1, 1]} : vector<8x24x64xbf16> to vector<8x16x64xbf16>
    %63 = vector.extract_strided_slice %2 {offsets = [6, 0], sizes = [1, 64], strides = [1, 1]} : vector<9x64xbf16> to vector<1x64xbf16>
    %64 = vector.shape_cast %63 : vector<1x64xbf16> to vector<64xbf16>
    %65 = vector.shape_cast %64 : vector<64xbf16> to vector<1x1x64xbf16>
    %66 = vector.broadcast %65 : vector<1x1x64xbf16> to vector<8x16x64xbf16>
    %67 = arith.mulf %62, %66 : vector<8x16x64xbf16>
    %68 = arith.extf %67 : vector<8x16x64xbf16> to vector<8x16x64xf32>
    %69 = arith.addf %57, %68 : vector<8x16x64xf32>
    %70 = vector.extract_strided_slice %61 {offsets = [0, 1, 0], sizes = [8, 16, 64], strides = [1, 1, 1]} : vector<8x24x64xbf16> to vector<8x16x64xbf16>
    %71 = vector.extract_strided_slice %2 {offsets = [7, 0], sizes = [1, 64], strides = [1, 1]} : vector<9x64xbf16> to vector<1x64xbf16>
    %72 = vector.shape_cast %71 : vector<1x64xbf16> to vector<64xbf16>
    %73 = vector.shape_cast %72 : vector<64xbf16> to vector<1x1x64xbf16>
    %74 = vector.broadcast %73 : vector<1x1x64xbf16> to vector<8x16x64xbf16>
    %75 = arith.mulf %70, %74 : vector<8x16x64xbf16>
    %76 = arith.extf %75 : vector<8x16x64xbf16> to vector<8x16x64xf32>
    %77 = arith.addf %69, %76 : vector<8x16x64xf32>
    %78 = vector.extract_strided_slice %61 {offsets = [0, 2, 0], sizes = [8, 16, 64], strides = [1, 1, 1]} : vector<8x24x64xbf16> to vector<8x16x64xbf16>
    %79 = vector.extract_strided_slice %2 {offsets = [8, 0], sizes = [1, 64], strides = [1, 1]} : vector<9x64xbf16> to vector<1x64xbf16>
    %80 = vector.shape_cast %79 : vector<1x64xbf16> to vector<64xbf16>
    %81 = vector.shape_cast %80 : vector<64xbf16> to vector<1x1x64xbf16>
    %82 = vector.broadcast %81 : vector<1x1x64xbf16> to vector<8x16x64xbf16>
    %83 = arith.mulf %78, %82 : vector<8x16x64xbf16>
    %84 = arith.extf %83 : vector<8x16x64xbf16> to vector<8x16x64xf32>
    %85 = arith.addf %77, %84 : vector<8x16x64xf32>
    %c0_13 = arith.constant 0 : index
    %c0_14 = arith.constant 0 : index
    %86 = vector.load %arg4[%c0_13, %c0_14] : memref<1x64xf32, #tpu.memory_space<vmem>>, vector<1x64xf32>
    %87 = vector.shape_cast %86 : vector<1x64xf32> to vector<1x1x64xf32>
    %88 = vector.broadcast %87 : vector<1x1x64xf32> to vector<8x16x64xf32>
    %89 = arith.addf %85, %88 : vector<8x16x64xf32>
    %cst = arith.constant 0.000000e+00 : f32
    %90 = vector.broadcast %cst : f32 to vector<8x16x64xf32>
    %91 = arith.maximumf %89, %90 : vector<8x16x64xf32>
    %92 = vector.shape_cast %91 : vector<8x16x64xf32> to vector<128x64xf32>
    %93 = arith.truncf %92 : vector<128x64xf32> to vector<128x64xbf16>
    %c0_15 = arith.constant 0 : index
    %c0_16 = arith.constant 0 : index
    %94 = vector.load %arg5[%c0_15, %c0_16] : memref<64x128xbf16, #tpu.memory_space<vmem>>, vector<64x128xbf16>
    %cst_17 = arith.constant dense<0.000000e+00> : vector<128x128xf32>
    %95 = tpu.matmul %93, %94, %cst_17 {dimension_numbers = #tpu.dot_dimension_numbers<[1], [0], [0], [1], [0, 0, 1, 1], [], []>} : vector<128x64xbf16>, vector<64x128xbf16>, vector<128x128xf32> -> vector<128x128xf32>
    %c0_18 = arith.constant 0 : index
    %c0_19 = arith.constant 0 : index
    %96 = vector.load %arg6[%c0_18, %c0_19] : memref<1x128xf32, #tpu.memory_space<vmem>>, vector<1x128xf32>
    %97 = vector.broadcast %96 : vector<1x128xf32> to vector<128x128xf32>
    %98 = arith.addf %95, %97 : vector<128x128xf32>
    %cst_20 = arith.constant 0.000000e+00 : f32
    %99 = vector.broadcast %cst_20 : f32 to vector<128x128xf32>
    %100 = arith.maximumf %98, %99 : vector<128x128xf32>
    %101 = arith.truncf %100 : vector<128x128xf32> to vector<128x128xbf16>
    %c0_21 = arith.constant 0 : index
    %c0_22 = arith.constant 0 : index
    %c0_23 = arith.constant 0 : index
    %102 = vector.load %arg7[%c0_21, %c0_22, %c0_23] : memref<1x128x128xbf16, #tpu.memory_space<vmem>>, vector<1x128x128xbf16>
    %103 = vector.shape_cast %102 : vector<1x128x128xbf16> to vector<128x128xbf16>
    %104 = vector.shape_cast %101 : vector<128x128xbf16> to vector<1x128x128xbf16>
    tpu.vector_store %arg7[%c0_21, %c0_22, %c0_23], %104 {strides = array<i32>} : memref<1x128x128xbf16, #tpu.memory_space<vmem>>, vector<1x128x128xbf16>,
    return
  }
  func.func @transform_0(%arg0: i32, %arg1: i32) -> (i32, i32, i32, i32, i32) {
    %c0_i32 = arith.constant 0 : i32
    %c0_i32_0 = arith.constant 0 : i32
    %c0_i32_1 = arith.constant 0 : i32
    %c0_i32_2 = arith.constant 0 : i32
    %c0_i32_3 = arith.constant 0 : i32
    return %arg0, %c0_i32, %c0_i32_0, %c0_i32_1, %c0_i32_2 : i32, i32, i32, i32, i32
  }
  func.func @transform_1(%arg0: i32, %arg1: i32) -> (i32, i32) {
    %c0_i32 = arith.constant 0 : i32
    %c0_i32_0 = arith.constant 0 : i32
    %c0_i32_1 = arith.constant 0 : i32
    return %c0_i32, %c0_i32_0 : i32, i32
  }
  func.func @transform_2(%arg0: i32, %arg1: i32) -> (i32, i32) {
    %c0_i32 = arith.constant 0 : i32
    %c0_i32_0 = arith.constant 0 : i32
    %c0_i32_1 = arith.constant 0 : i32
    return %c0_i32, %c0_i32_0 : i32, i32
  }
  func.func @transform_3(%arg0: i32, %arg1: i32) -> (i32, i32) {
    %c0_i32 = arith.constant 0 : i32
    %c0_i32_0 = arith.constant 0 : i32
    %c0_i32_1 = arith.constant 0 : i32
    return %c0_i32, %c0_i32_0 : i32, i32
  }
  func.func @transform_4(%arg0: i32, %arg1: i32) -> (i32, i32) {
    %c0_i32 = arith.constant 0 : i32
    %c0_i32_0 = arith.constant 0 : i32
    %c0_i32_1 = arith.constant 0 : i32
    return %c0_i32, %c0_i32_0 : i32, i32
  }
  func.func @transform_5(%arg0: i32, %arg1: i32) -> (i32, i32, i32) {
    %c0_i32 = arith.constant 0 : i32
    %c0_i32_0 = arith.constant 0 : i32
    return %arg0, %arg1, %c0_i32 : i32, i32, i32
  }
}

</mosaic_0001>

<llo_original>
// kernel: mobilev1_block_forward.1
$region0: #{mobilev1_block_forward.1}
  #allocation0 [shape = 'u32[]', space=smem, size = 0x4, offset = 0x4, fixed_abs, tag = 'smem constant byte address 0x4 - core index']
  #allocation1 [shape = 'u32[144,128]{1,0:T(1,128)}', space=vmem, size = 0x12000, scoped, tag = 'internal scratch']
  %s0 = inlined_call_operand.vmem [shape: bf16[2,1,18,24,64], index: 0, kind: input, shape index: {}]
  %s1 = inlined_call_operand.vmem [shape: bf16[9,64], index: 1, kind: input, shape index: {}]
  %s2 = inlined_call_operand.vmem [shape: f32[1,64], index: 2, kind: input, shape index: {}]
  %s3 = inlined_call_operand.vmem [shape: bf16[64,128], index: 3, kind: input, shape index: {}]
  %s4 = inlined_call_operand.vmem [shape: f32[1,128], index: 4, kind: input, shape index: {}]
  %s5 = inlined_call_operand.hbm [shape: bf16[2,256,128], index: 5, kind: output, shape index: {}]
  %s6 = sld [smem:[#allocation0]]
  $region53: #{mobilev1_block_forward.1} parent=0
    _
  %s8 = ssub.s32 1, %s6
  %s9 = scalar_select 0, %s8, %s6
  $region1: #{mobilev1_block_forward.1} parent=0
    #allocation2 [shape = 'u8[65536]{0}', space=vmem, size = 0x10000, scoped, tag = 'output window, operand 0']
    #allocation3 [shape = 's32[2]{0}', space=sflag, size = 0x8, scoped, tag = 'scoped memory for mobilev1_block_forward.1']
    %10 = vsyncpa [#allocation3], 0
    %s11 = scalar_lea.sflag [#allocation3], 1
    %12 = vsyncpa %s11, 0
    loop: start=0, step=1, limit=6
    $region2: #{mobilev1_block_forward.1} parent=1 // loop_pre_header
      _
    $region3: #{mobilev1_block_forward.1} parent=1 // loop_header
      %s14 = sphi 0, %s18
      %p15 = scmp.ge.s32.totalorder %s14, 6
      %s21 = sphi 0, %s33
      %s22 = sphi 0, %s29
      %s23 = sphi 0, %s21
      %s24 = sphi 0, %s22
      %s25 = sphi 0, %s23
      %s26 = sphi 0, %s24
      %s36 = sphi 0, %s38
      %s39 = sphi 0, %s36
      %s40 = sphi 0, %s39
      %s56 = sphi 0, %s40
      %s60 = sphi 0, %s60
      %s62 = sphi 0, %s60
      %s63 = sphi 0, %s62
      %s77 = sphi 0, %s63
      %s81 = sphi 0, %s81
      %s83 = sphi 0, %s81
      %s84 = sphi 0, %s83
      %s98 = sphi 0, %s84
      %s102 = sphi 0, %s102
      %s104 = sphi 0, %s102
      %s105 = sphi 0, %s104
      %s119 = sphi 0, %s105
      %s123 = sphi 0, %s123
      %s125 = sphi 0, %s123
      %s126 = sphi 0, %s125
      %s140 = sphi 0, %s126
      %s148 = sphi 0, %s150
      %s151 = sphi 0, %s148
      %s152 = sphi 0, %s151
      %s168 = sphi 0, %s152
    $region4: #{mobilev1_block_forward.1} parent=1 // loop_header_branch
      %17 = sbr.rel (%p15) target = $region8
    $region5: #{mobilev1_block_forward.1} parent=1 // loop_body
      %s19 = ssub.s32 %s14, 1
      %s20 = ssub.s32 %s14, 2
      %s27 = sadd.s32 1, %s22
      %p28 = scmp.ge.s32.totalorder %s27, 2
      %s29 = scalar_select %p28, 0, %s27
      %s30 = sadd.s32 1, %s21
      %s31 = scalar_select %p28, %s30, %s21
      %p32 = scmp.ge.s32.totalorder %s31, 2
      %s33 = scalar_select %p32, 0, %s31
      %s34 = ssub.s32 %s21, %s33
      %p35 = scmp.eq.s32.totalorder %s34, 0
      %s37 = sadd.s32 %s36, 1
      %s38 = scalar_select %p35, %s36, %s37
      %p41 = pneg %p35
      %p42 = scmp.eq.s32.totalorder %s14, 3
      %p43 = por %p41, %p42
      %p44 = scmp.ne.s32.totalorder %s36, %s39
      %p45 = scmp.eq.s32.totalorder %s14, 0
      %p46 = por %p44, %p45
      %p47 = scmp.ne.s32.totalorder %s36, %s39
      %p48 = scmp.eq.s32.totalorder %s19, 3
      %p49 = por %p47, %p48
      %p50 = scmp.ne.s32.totalorder %s39, %s40
      %p51 = scmp.eq.s32.totalorder %s19, 0
      %p52 = por %p50, %p51
      %p53 = scmp.ne.s32.totalorder %s39, %s40
      %p54 = scmp.eq.s32.totalorder %s20, 3
      %p55 = por %p53, %p54
      %p57 = scmp.ne.s32.totalorder %s40, %s56
      %p58 = scmp.eq.s32.totalorder %s20, 0
      %p59 = por %p57, %p58
      %s61 = sadd.s32 %s60, 1
      %p64 = scmp.eq.s32.totalorder %s14, 3
      %p65 = scmp.ne.s32.totalorder %s60, %s62
      %p66 = scmp.eq.s32.totalorder %s14, 0
      %p67 = por %p65, %p66
      %p68 = scmp.ne.s32.totalorder %s60, %s62
      %p69 = scmp.eq.s32.totalorder %s19, 3
      %p70 = por %p68, %p69
      %p71 = scmp.ne.s32.totalorder %s62, %s63
      %p72 = scmp.eq.s32.totalorder %s19, 0
      %p73 = por %p71, %p72
      %p74 = scmp.ne.s32.totalorder %s62, %s63
      %p75 = scmp.eq.s32.totalorder %s20, 3
      %p76 = por %p74, %p75
      %p78 = scmp.ne.s32.totalorder %s63, %s77
      %p79 = scmp.eq.s32.totalorder %s20, 0
      %p80 = por %p78, %p79
      %s82 = sadd.s32 %s81, 1
      %p85 = scmp.eq.s32.totalorder %s14, 3
      %p86 = scmp.ne.s32.totalorder %s81, %s83
      %p87 = scmp.eq.s32.totalorder %s14, 0
      %p88 = por %p86, %p87
      %p89 = scmp.ne.s32.totalorder %s81, %s83
      %p90 = scmp.eq.s32.totalorder %s19, 3
      %p91 = por %p89, %p90
      %p92 = scmp.ne.s32.totalorder %s83, %s84
      %p93 = scmp.eq.s32.totalorder %s19, 0
      %p94 = por %p92, %p93
      %p95 = scmp.ne.s32.totalorder %s83, %s84
      %p96 = scmp.eq.s32.totalorder %s20, 3
      %p97 = por %p95, %p96
      %p99 = scmp.ne.s32.totalorder %s84, %s98
      %p100 = scmp.eq.s32.totalorder %s20, 0
      %p101 = por %p99, %p100
      %s103 = sadd.s32 %s102, 1
      %p106 = scmp.eq.s32.totalorder %s14, 3
      %p107 = scmp.ne.s32.totalorder %s102, %s104
      %p108 = scmp.eq.s32.totalorder %s14, 0
      %p109 = por %p107, %p108
      %p110 = scmp.ne.s32.totalorder %s102, %s104
      %p111 = scmp.eq.s32.totalorder %s19, 3
      %p112 = por %p110, %p111
      %p113 = scmp.ne.s32.totalorder %s104, %s105
      %p114 = scmp.eq.s32.totalorder %s19, 0
      %p115 = por %p113, %p114
      %p116 = scmp.ne.s32.totalorder %s104, %s105
      %p117 = scmp.eq.s32.totalorder %s20, 3
      %p118 = por %p116, %p117
      %p120 = scmp.ne.s32.totalorder %s105, %s119
      %p121 = scmp.eq.s32.totalorder %s20, 0
      %p122 = por %p120, %p121
      %s124 = sadd.s32 %s123, 1
      %p127 = scmp.eq.s32.totalorder %s14, 3
      %p128 = scmp.ne.s32.totalorder %s123, %s125
      %p129 = scmp.eq.s32.totalorder %s14, 0
      %p130 = por %p128, %p129
      %p131 = scmp.ne.s32.totalorder %s123, %s125
      %p132 = scmp.eq.s32.totalorder %s19, 3
      %p133 = por %p131, %p132
      %p134 = scmp.ne.s32.totalorder %s125, %s126
      %p135 = scmp.eq.s32.totalorder %s19, 0
      %p136 = por %p134, %p135
      %p137 = scmp.ne.s32.totalorder %s125, %s126
      %p138 = scmp.eq.s32.totalorder %s20, 3
      %p139 = por %p137, %p138
      %p141 = scmp.ne.s32.totalorder %s126, %s140
      %p142 = scmp.eq.s32.totalorder %s20, 0
      %p143 = por %p141, %p142
      %s144 = ssub.s32 %s21, %s33
      %s145 = ssub.s32 %s22, %s29
      %s146 = sor.u32 %s144, %s145
      %p147 = scmp.eq.s32.totalorder %s146, 0
      %s149 = sadd.s32 %s148, 1
      %s150 = scalar_select %p147, %s148, %s149
      %p153 = pneg %p147
      %p154 = scmp.eq.s32.totalorder %s14, 3
      %p155 = por %p153, %p154
      %p156 = scmp.ne.s32.totalorder %s148, %s151
      %p157 = scmp.eq.s32.totalorder %s14, 0
      %p158 = por %p156, %p157
      %p159 = scmp.ne.s32.totalorder %s148, %s151
      %p160 = scmp.eq.s32.totalorder %s19, 3
      %p161 = por %p159, %p160
      %p162 = scmp.ne.s32.totalorder %s151, %s152
      %p163 = scmp.eq.s32.totalorder %s19, 0
      %p164 = por %p162, %p163
      %p165 = scmp.ne.s32.totalorder %s151, %s152
      %p166 = scmp.eq.s32.totalorder %s20, 3
      %p167 = por %p165, %p166
      %p169 = scmp.ne.s32.totalorder %s152, %s168
      %p170 = scmp.eq.s32.totalorder %s20, 0
      %p171 = por %p169, %p170
      %p172 = scmp.le.s32.totalorder 1, %s14
      %p173 = scmp.lt.s32.totalorder %s14, 5
      %p174 = pnand %p172, %p173
      %p175 = pneg %p174
      // Predicated region
      $region9: #{mobilev1_block_forward.1} parent=5 // pred_check
        _
      $region10: #{mobilev1_block_forward.1} parent=5 // pred_check_branch
        %177 = sbr.rel (%p174) target = $region12
      $region11: #{mobilev1_block_forward.1} parent=5 // pred_region
        %s178 = ssub.s32 %s14, 1
        // Predicated region
        $region13: #{mobilev1_block_forward.1} parent=11 // pred_check
          %p179 = pneg %p73
        $region14: #{mobilev1_block_forward.1} parent=11 // pred_check_branch
          %181 = sbr.rel (%p179) target = $region16
        $region15: #{mobilev1_block_forward.1} parent=11 // pred_region
          _
        $region16: #{mobilev1_block_forward.1} parent=11 // pred_fallthru
          _
        // Predicated region
        $region17: #{mobilev1_block_forward.1} parent=11 // pred_check
          %p182 = pneg %p94
        $region18: #{mobilev1_block_forward.1} parent=11 // pred_check_branch
          %184 = sbr.rel (%p182) target = $region20
        $region19: #{mobilev1_block_forward.1} parent=11 // pred_region
          _
        $region20: #{mobilev1_block_forward.1} parent=11 // pred_fallthru
          _
        // Predicated region
        $region21: #{mobilev1_block_forward.1} parent=11 // pred_check
          %p185 = pneg %p115
        $region22: #{mobilev1_block_forward.1} parent=11 // pred_check_branch
          %187 = sbr.rel (%p185) target = $region24
        $region23: #{mobilev1_block_forward.1} parent=11 // pred_region
          _
        $region24: #{mobilev1_block_forward.1} parent=11 // pred_fallthru
          _
        // Predicated region
        $region25: #{mobilev1_block_forward.1} parent=11 // pred_check
          %p188 = pneg %p136
        $region26: #{mobilev1_block_forward.1} parent=11 // pred_check_branch
          %190 = sbr.rel (%p188) target = $region28
        $region27: #{mobilev1_block_forward.1} parent=11 // pred_region
          _
        $region28: #{mobilev1_block_forward.1} parent=11 // pred_fallthru
          _
      $region12: #{mobilev1_block_forward.1} parent=5 // pred_fallthru
        _
      %p191 = scmp.lt.s32.totalorder %s14, 4
      // Predicated region
      $region29: #{mobilev1_block_forward.1} parent=5 // pred_check
        %p192 = pneg %p191
      $region30: #{mobilev1_block_forward.1} parent=5 // pred_check_branch
        %194 = sbr.rel (%p192) target = $region32
      $region31: #{mobilev1_block_forward.1} parent=5 // pred_region
        // Predicated region
        $region33: #{mobilev1_block_forward.1} parent=31 // pred_check
          %p195 = pneg %p46
        $region34: #{mobilev1_block_forward.1} parent=31 // pred_check_branch
          %197 = sbr.rel (%p195) target = $region36
        $region35: #{mobilev1_block_forward.1} parent=31 // pred_region
          %p198 = scmp.lt.s32.totalorder %s21, 1
          %s199 = scalar_select %p198, %s21, 1
          %s200 = smul.addr %s199, 54
          %s201 = smul.addr %s200, 4
          %s202 = scalar_lea.vmem %s0, %s201
        $region36: #{mobilev1_block_forward.1} parent=31 // pred_fallthru
          _
      $region32: #{mobilev1_block_forward.1} parent=5 // pred_fallthru
        _
      %p203 = scmp.le.s32.totalorder 1, %s14
      %p204 = scmp.lt.s32.totalorder %s14, 5
      %p205 = pnand %p203, %p204
      %p206 = pneg %p205
      // Predicated region
      $region37: #{mobilev1_block_forward.1} parent=5 // pred_check
        _
      $region38: #{mobilev1_block_forward.1} parent=5 // pred_check_branch
        %208 = sbr.rel (%p205) target = $region40
      $region39: #{mobilev1_block_forward.1} parent=5 // pred_region
        %s209 = ssub.s32 %s14, 1
        %p210 = scmp.lt.s32.totalorder %s23, 1
        %s211 = scalar_select %p210, %s23, 1
        %s212 = smul.addr %s211, 54
        %s213 = smul.addr %s212, 4
        %s214 = scalar_lea.vmem %s0, %s213
        %p215 = pneg %p52
        %p216 = pneg %p49
        %p217 = pneg %p73
        %p218 = pneg %p70
        %p219 = pneg %p94
        %p220 = pneg %p91
        %p221 = pneg %p115
        %p222 = pneg %p112
        %p223 = pneg %p136
        %p224 = pneg %p133
        %p225 = pneg %p164
        %p226 = pneg %p161
        %s227 = sand.u32 %s151, 1
        %s228 = scalar_lea.sflag [#allocation3], %s227
        %s229 = sand.u32 %s151, 1
        %s230 = smul.addr %s229, 64
        %s231 = scalar_lea.vmem [#allocation2], %s230
        %p232 = scmp.lt.s32.totalorder %s23, 1
        %s233 = scalar_select %p232, %s23, 1
        %s234 = smul.addr %s233, 54
        %s235 = smul.addr %s234, 4
        %s236 = scalar_lea.vmem %s0, %s235
        %s237 = smul.u32 16, %s24
        %s239 = smul.u32 %s24, 8
        %v240 = vld [vmem:[%s1] sm:$0xf]
        %v241 = vld [vmem:[%s1 + $0x4] sm:$0x1]
        %s242 = smul.u32 %s239, 3
        %s243 = smul.addr %s242, 4
        %s244 = scalar_lea.vmem %s236, %s243
        %v245 = vld [vmem:[%s244] sm:$0xf]
        %v246 = vld [vmem:[%s244 + $0x4] sm:$0xf]
        %v247 = vld [vmem:[%s244 + $0x8] sm:$0xf]
        %v248 = vld [vmem:[%s244 + $0xc] sm:$0xf]
        %v249 = vld [vmem:[%s244 + $0x10] sm:$0xf]
        %v250 = vld [vmem:[%s244 + $0x14] sm:$0xf]
        %v251 = vld [vmem:[%s244 + $0x18] sm:$0xf]
        %v252 = vld [vmem:[%s244 + $0x1c] sm:$0xf]
        %v253 = vld [vmem:[%s244 + $0x20] sm:$0xf]
        %v254 = vld [vmem:[%s244 + $0x24] sm:$0xf]
        %v255 = vld [vmem:[%s244 + $0x28] sm:$0xf]
        %v256 = vld [vmem:[%s244 + $0x2c] sm:$0xf]
        %v257 = vld [vmem:[%s244 + $0x30] sm:$0xf]
        %v258 = vld [vmem:[%s244 + $0x34] sm:$0xf]
        %v259 = vld [vmem:[%s244 + $0x38] sm:$0xf]
        %v260 = vld [vmem:[%s244 + $0x3c] sm:$0xf]
        %v261 = vld [vmem:[%s244 + $0x40] sm:$0xf]
        %v262 = vld [vmem:[%s244 + $0x44] sm:$0xf]
        %v263 = vld [vmem:[%s244 + $0x48] sm:$0xf]
        %v264 = vld [vmem:[%s244 + $0x4c] sm:$0xf]
        %v265 = vld [vmem:[%s244 + $0x50] sm:$0xf]
        %v266 = vld [vmem:[%s244 + $0x54] sm:$0xf]
        %v267 = vld [vmem:[%s244 + $0x58] sm:$0xf]
        %v268 = vld [vmem:[%s244 + $0x5c] sm:$0xf]
        %v270 = vpack.i.b16 %v240, %v240
        %v272 = vlaneseq
        %v273 = vshrl.u32 %v272, 7
        %v274 = vsub.s32 0, %v273
        %v275 = vrot.slane %v270, %v274
        %v277 = vunpack.c.l.b16 %v275
        %v278 = vpack.c.b16 %v277, %v277
        %v280 = vmul.bf16 %v245, %v278
        %v281 = vmul.bf16 %v246, %v278
        %v282 = vmul.bf16 %v248, %v278
        %v283 = vmul.bf16 %v249, %v278
        %v284 = vmul.bf16 %v251, %v278
        %v285 = vmul.bf16 %v252, %v278
        %v286 = vmul.bf16 %v254, %v278
        %v287 = vmul.bf16 %v255, %v278
        %v288 = vmul.bf16 %v257, %v278
        %v289 = vmul.bf16 %v258, %v278
        %v290 = vmul.bf16 %v260, %v278
        %v291 = vmul.bf16 %v261, %v278
        %v292 = vmul.bf16 %v263, %v278
        %v293 = vmul.bf16 %v264, %v278
        %v294 = vmul.bf16 %v266, %v278
        %v295 = vmul.bf16 %v267, %v278
        %v296 = vunpack.c.l.bf16 %v280
        %v297 = vunpack.c.l.bf16 %v281
        %v298 = vunpack.c.l.bf16 %v282
        %v299 = vunpack.c.l.bf16 %v283
        %v300 = vunpack.c.l.bf16 %v284
        %v301 = vunpack.c.l.bf16 %v285
        %v302 = vunpack.c.l.bf16 %v286
        %v303 = vunpack.c.l.bf16 %v287
        %v304 = vunpack.c.l.bf16 %v288
        %v305 = vunpack.c.l.bf16 %v289
        %v306 = vunpack.c.l.bf16 %v290
        %v307 = vunpack.c.l.bf16 %v291
        %v308 = vunpack.c.l.bf16 %v292
        %v309 = vunpack.c.l.bf16 %v293
        %v310 = vunpack.c.l.bf16 %v294
        %v311 = vunpack.c.l.bf16 %v295
        %v312 = vshrl.u32 %v240, 16
        %v313 = vpack.i.b16 %v312, %v312
        %v315 = vlaneseq
        %v316 = vshrl.u32 %v315, 7
        %v317 = vsub.s32 0, %v316
        %v318 = vrot.slane %v313, %v317
        %v320 = vunpack.c.l.b16 %v318
        %v321 = vpack.c.b16 %v320, %v320
        %v323 = vmul.bf16 %v245, %v321
        %v324 = vmul.bf16 %v246, %v321
        %v325 = vmul.bf16 %v247, %v321
        %v326 = vmul.bf16 %v248, %v321
        %v327 = vmul.bf16 %v249, %v321
        %v328 = vmul.bf16 %v250, %v321
        %v329 = vmul.bf16 %v251, %v321
        %v330 = vmul.bf16 %v252, %v321
        %v331 = vmul.bf16 %v253, %v321
        %v332 = vmul.bf16 %v254, %v321
        %v333 = vmul.bf16 %v255, %v321
        %v334 = vmul.bf16 %v256, %v321
        %v335 = vmul.bf16 %v257, %v321
        %v336 = vmul.bf16 %v258, %v321
        %v337 = vmul.bf16 %v259, %v321
        %v338 = vmul.bf16 %v260, %v321
        %v339 = vmul.bf16 %v261, %v321
        %v340 = vmul.bf16 %v262, %v321
        %v341 = vmul.bf16 %v263, %v321
        %v342 = vmul.bf16 %v264, %v321
        %v343 = vmul.bf16 %v265, %v321
        %v344 = vmul.bf16 %v266, %v321
        %v345 = vmul.bf16 %v267, %v321
        %v346 = vmul.bf16 %v268, %v321
        %v347 = vunpack.c.l.bf16 %v323
        %v348 = vunpack.c.l.bf16 %v324
        %v349 = vunpack.c.l.bf16 %v325
        %v350 = vunpack.c.l.bf16 %v326
        %v351 = vunpack.c.l.bf16 %v327
        %v352 = vunpack.c.l.bf16 %v328
        %v353 = vunpack.c.l.bf16 %v329
        %v354 = vunpack.c.l.bf16 %v330
        %v355 = vunpack.c.l.bf16 %v331
        %v356 = vunpack.c.l.bf16 %v332
        %v357 = vunpack.c.l.bf16 %v333
        %v358 = vunpack.c.l.bf16 %v334
        %v359 = vunpack.c.l.bf16 %v335
        %v360 = vunpack.c.l.bf16 %v336
        %v361 = vunpack.c.l.bf16 %v337
        %v362 = vunpack.c.l.bf16 %v338
        %v363 = vunpack.c.l.bf16 %v339
        %v364 = vunpack.c.l.bf16 %v340
        %v365 = vunpack.c.l.bf16 %v341
        %v366 = vunpack.c.l.bf16 %v342
        %v367 = vunpack.c.l.bf16 %v343
        %v368 = vunpack.c.l.bf16 %v344
        %v369 = vunpack.c.l.bf16 %v345
        %v370 = vunpack.c.l.bf16 %v346
        %vm395 = vcmask 1046528
        %v396 = vrot.slane %v347, 1
        %v397 = vrot.slane %v348, 1
        %v398 = vsel %vm395, %v396, %v397
        %v399 = vrot.slane %v349, 1
        %v400 = vsel %vm395, %v397, %v399
        %v401 = vrot.slane %v350, 1
        %v402 = vrot.slane %v351, 1
        %v403 = vsel %vm395, %v401, %v402
        %v404 = vrot.slane %v352, 1
        %v405 = vsel %vm395, %v402, %v404
        %v406 = vrot.slane %v353, 1
        %v407 = vrot.slane %v354, 1
        %v408 = vsel %vm395, %v406, %v407
        %v409 = vrot.slane %v355, 1
        %v410 = vsel %vm395, %v407, %v409
        %v411 = vrot.slane %v356, 1
        %v412 = vrot.slane %v357, 1
        %v413 = vsel %vm395, %v411, %v412
        %v414 = vrot.slane %v358, 1
        %v415 = vsel %vm395, %v412, %v414
        %v416 = vrot.slane %v359, 1
        %v417 = vrot.slane %v360, 1
        %v418 = vsel %vm395, %v416, %v417
        %v419 = vrot.slane %v361, 1
        %v420 = vsel %vm395, %v417, %v419
        %v421 = vrot.slane %v362, 1
        %v422 = vrot.slane %v363, 1
        %v423 = vsel %vm395, %v421, %v422
        %v424 = vrot.slane %v364, 1
        %v425 = vsel %vm395, %v422, %v424
        %v426 = vrot.slane %v365, 1
        %v427 = vrot.slane %v366, 1
        %v428 = vsel %vm395, %v426, %v427
        %v429 = vrot.slane %v367, 1
        %v430 = vsel %vm395, %v427, %v429
        %v431 = vrot.slane %v368, 1
        %v432 = vrot.slane %v369, 1
        %v433 = vsel %vm395, %v431, %v432
        %v434 = vrot.slane %v370, 1
        %v435 = vsel %vm395, %v432, %v434
        %v452 = vadd.f32 %v296, %v398
        %v453 = vadd.f32 %v297, %v400
        %v454 = vadd.f32 %v298, %v403
        %v455 = vadd.f32 %v299, %v405
        %v456 = vadd.f32 %v300, %v408
        %v457 = vadd.f32 %v301, %v410
        %v458 = vadd.f32 %v302, %v413
        %v459 = vadd.f32 %v303, %v415
        %v460 = vadd.f32 %v304, %v418
        %v461 = vadd.f32 %v305, %v420
        %v462 = vadd.f32 %v306, %v423
        %v463 = vadd.f32 %v307, %v425
        %v464 = vadd.f32 %v308, %v428
        %v465 = vadd.f32 %v309, %v430
        %v466 = vadd.f32 %v310, %v433
        %v467 = vadd.f32 %v311, %v435
        %v468 = vlaneseq
        %v469 = vshrl.u32 %v468, 7
        %v470 = vsub.s32 1, %v469
        %v471 = vrot.slane %v270, %v470
        %v473 = vunpack.c.l.b16 %v471
        %v474 = vpack.c.b16 %v473, %v473
        %v476 = vmul.bf16 %v245, %v474
        %v477 = vmul.bf16 %v246, %v474
        %v478 = vmul.bf16 %v247, %v474
        %v479 = vmul.bf16 %v248, %v474
        %v480 = vmul.bf16 %v249, %v474
        %v481 = vmul.bf16 %v250, %v474
        %v482 = vmul.bf16 %v251, %v474
        %v483 = vmul.bf16 %v252, %v474
        %v484 = vmul.bf16 %v253, %v474
        %v485 = vmul.bf16 %v254, %v474
        %v486 = vmul.bf16 %v255, %v474
        %v487 = vmul.bf16 %v256, %v474
        %v488 = vmul.bf16 %v257, %v474
        %v489 = vmul.bf16 %v258, %v474
        %v490 = vmul.bf16 %v259, %v474
        %v491 = vmul.bf16 %v260, %v474
        %v492 = vmul.bf16 %v261, %v474
        %v493 = vmul.bf16 %v262, %v474
        %v494 = vmul.bf16 %v263, %v474
        %v495 = vmul.bf16 %v264, %v474
        %v496 = vmul.bf16 %v265, %v474
        %v497 = vmul.bf16 %v266, %v474
        %v498 = vmul.bf16 %v267, %v474
        %v499 = vmul.bf16 %v268, %v474
        %v500 = vunpack.c.l.bf16 %v476
        %v501 = vunpack.c.l.bf16 %v477
        %v502 = vunpack.c.l.bf16 %v478
        %v503 = vunpack.c.l.bf16 %v479
        %v504 = vunpack.c.l.bf16 %v480
        %v505 = vunpack.c.l.bf16 %v481
        %v506 = vunpack.c.l.bf16 %v482
        %v507 = vunpack.c.l.bf16 %v483
        %v508 = vunpack.c.l.bf16 %v484
        %v509 = vunpack.c.l.bf16 %v485
        %v510 = vunpack.c.l.bf16 %v486
        %v511 = vunpack.c.l.bf16 %v487
        %v512 = vunpack.c.l.bf16 %v488
        %v513 = vunpack.c.l.bf16 %v489
        %v514 = vunpack.c.l.bf16 %v490
        %v515 = vunpack.c.l.bf16 %v491
        %v516 = vunpack.c.l.bf16 %v492
        %v517 = vunpack.c.l.bf16 %v493
        %v518 = vunpack.c.l.bf16 %v494
        %v519 = vunpack.c.l.bf16 %v495
        %v520 = vunpack.c.l.bf16 %v496
        %v521 = vunpack.c.l.bf16 %v497
        %v522 = vunpack.c.l.bf16 %v498
        %v523 = vunpack.c.l.bf16 %v499
        %vm548 = vcmask 1045504
        %v549 = vrot.slane %v500, 2
        %v550 = vrot.slane %v501, 2
        %v551 = vsel %vm548, %v549, %v550
        %v552 = vrot.slane %v502, 2
        %v553 = vsel %vm548, %v550, %v552
        %v554 = vrot.slane %v503, 2
        %v555 = vrot.slane %v504, 2
        %v556 = vsel %vm548, %v554, %v555
        %v557 = vrot.slane %v505, 2
        %v558 = vsel %vm548, %v555, %v557
        %v559 = vrot.slane %v506, 2
        %v560 = vrot.slane %v507, 2
        %v561 = vsel %vm548, %v559, %v560
        %v562 = vrot.slane %v508, 2
        %v563 = vsel %vm548, %v560, %v562
        %v564 = vrot.slane %v509, 2
        %v565 = vrot.slane %v510, 2
        %v566 = vsel %vm548, %v564, %v565
        %v567 = vrot.slane %v511, 2
        %v568 = vsel %vm548, %v565, %v567
        %v569 = vrot.slane %v512, 2
        %v570 = vrot.slane %v513, 2
        %v571 = vsel %vm548, %v569, %v570
        %v572 = vrot.slane %v514, 2
        %v573 = vsel %vm548, %v570, %v572
        %v574 = vrot.slane %v515, 2
        %v575 = vrot.slane %v516, 2
        %v576 = vsel %vm548, %v574, %v575
        %v577 = vrot.slane %v517, 2
        %v578 = vsel %vm548, %v575, %v577
        %v579 = vrot.slane %v518, 2
        %v580 = vrot.slane %v519, 2
        %v581 = vsel %vm548, %v579, %v580
        %v582 = vrot.slane %v520, 2
        %v583 = vsel %vm548, %v580, %v582
        %v584 = vrot.slane %v521, 2
        %v585 = vrot.slane %v522, 2
        %v586 = vsel %vm548, %v584, %v585
        %v587 = vrot.slane %v523, 2
        %v588 = vsel %vm548, %v585, %v587
        %v605 = vadd.f32 %v452, %v551
        %v606 = vadd.f32 %v453, %v553
        %v607 = vadd.f32 %v454, %v556
        %v608 = vadd.f32 %v455, %v558
        %v609 = vadd.f32 %v456, %v561
        %v610 = vadd.f32 %v457, %v563
        %v611 = vadd.f32 %v458, %v566
        %v612 = vadd.f32 %v459, %v568
        %v613 = vadd.f32 %v460, %v571
        %v614 = vadd.f32 %v461, %v573
        %v615 = vadd.f32 %v462, %v576
        %v616 = vadd.f32 %v463, %v578
        %v617 = vadd.f32 %v464, %v581
        %v618 = vadd.f32 %v465, %v583
        %v619 = vadd.f32 %v466, %v586
        %v620 = vadd.f32 %v467, %v588
        %s621 = sadd.s32 %s239, 1
        %s622 = smul.u32 %s621, 3
        %s623 = smul.addr %s622, 4
        %s624 = scalar_lea.vmem %s236, %s623
        %v625 = vld [vmem:[%s624] sm:$0xf]
        %v626 = vld [vmem:[%s624 + $0x4] sm:$0xf]
        %v627 = vld [vmem:[%s624 + $0x8] sm:$0xf]
        %v628 = vld [vmem:[%s624 + $0xc] sm:$0xf]
        %v629 = vld [vmem:[%s624 + $0x10] sm:$0xf]
        %v630 = vld [vmem:[%s624 + $0x14] sm:$0xf]
        %v631 = vld [vmem:[%s624 + $0x18] sm:$0xf]
        %v632 = vld [vmem:[%s624 + $0x1c] sm:$0xf]
        %v633 = vld [vmem:[%s624 + $0x20] sm:$0xf]
        %v634 = vld [vmem:[%s624 + $0x24] sm:$0xf]
        %v635 = vld [vmem:[%s624 + $0x28] sm:$0xf]
        %v636 = vld [vmem:[%s624 + $0x2c] sm:$0xf]
        %v637 = vld [vmem:[%s624 + $0x30] sm:$0xf]
        %v638 = vld [vmem:[%s624 + $0x34] sm:$0xf]
        %v639 = vld [vmem:[%s624 + $0x38] sm:$0xf]
        %v640 = vld [vmem:[%s624 + $0x3c] sm:$0xf]
        %v641 = vld [vmem:[%s624 + $0x40] sm:$0xf]
        %v642 = vld [vmem:[%s624 + $0x44] sm:$0xf]
        %v643 = vld [vmem:[%s624 + $0x48] sm:$0xf]
        %v644 = vld [vmem:[%s624 + $0x4c] sm:$0xf]
        %v645 = vld [vmem:[%s624 + $0x50] sm:$0xf]
        %v646 = vld [vmem:[%s624 + $0x54] sm:$0xf]
        %v647 = vld [vmem:[%s624 + $0x58] sm:$0xf]
        %v648 = vld [vmem:[%s624 + $0x5c] sm:$0xf]
        %v649 = vlaneseq
        %v650 = vshrl.u32 %v649, 7
        %v651 = vsub.s32 1, %v650
        %v652 = vrot.slane %v313, %v651
        %v654 = vunpack.c.l.b16 %v652
        %v655 = vpack.c.b16 %v654, %v654
        %v657 = vmul.bf16 %v625, %v655
        %v658 = vmul.bf16 %v626, %v655
        %v659 = vmul.bf16 %v628, %v655
        %v660 = vmul.bf16 %v629, %v655
        %v661 = vmul.bf16 %v631, %v655
        %v662 = vmul.bf16 %v632, %v655
        %v663 = vmul.bf16 %v634, %v655
        %v664 = vmul.bf16 %v635, %v655
        %v665 = vmul.bf16 %v637, %v655
        %v666 = vmul.bf16 %v638, %v655
        %v667 = vmul.bf16 %v640, %v655
        %v668 = vmul.bf16 %v641, %v655
        %v669 = vmul.bf16 %v643, %v655
        %v670 = vmul.bf16 %v644, %v655
        %v671 = vmul.bf16 %v646, %v655
        %v672 = vmul.bf16 %v647, %v655
        %v673 = vunpack.c.l.bf16 %v657
        %v674 = vunpack.c.l.bf16 %v658
        %v675 = vunpack.c.l.bf16 %v659
        %v676 = vunpack.c.l.bf16 %v660
        %v677 = vunpack.c.l.bf16 %v661
        %v678 = vunpack.c.l.bf16 %v662
        %v679 = vunpack.c.l.bf16 %v663
        %v680 = vunpack.c.l.bf16 %v664
        %v681 = vunpack.c.l.bf16 %v665
        %v682 = vunpack.c.l.bf16 %v666
        %v683 = vunpack.c.l.bf16 %v667
        %v684 = vunpack.c.l.bf16 %v668
        %v685 = vunpack.c.l.bf16 %v669
        %v686 = vunpack.c.l.bf16 %v670
        %v687 = vunpack.c.l.bf16 %v671
        %v688 = vunpack.c.l.bf16 %v672
        %v689 = vadd.f32 %v605, %v673
        %v690 = vadd.f32 %v606, %v674
        %v691 = vadd.f32 %v607, %v675
        %v692 = vadd.f32 %v608, %v676
        %v693 = vadd.f32 %v609, %v677
        %v694 = vadd.f32 %v610, %v678
        %v695 = vadd.f32 %v611, %v679
        %v696 = vadd.f32 %v612, %v680
        %v697 = vadd.f32 %v613, %v681
        %v698 = vadd.f32 %v614, %v682
        %v699 = vadd.f32 %v615, %v683
        %v700 = vadd.f32 %v616, %v684
        %v701 = vadd.f32 %v617, %v685
        %v702 = vadd.f32 %v618, %v686
        %v703 = vadd.f32 %v619, %v687
        %v704 = vadd.f32 %v620, %v688
        %v705 = vlaneseq
        %v706 = vshrl.u32 %v705, 7
        %v707 = vsub.s32 2, %v706
        %v708 = vrot.slane %v270, %v707
        %v710 = vunpack.c.l.b16 %v708
        %v711 = vpack.c.b16 %v710, %v710
        %v713 = vmul.bf16 %v625, %v711
        %v714 = vmul.bf16 %v626, %v711
        %v715 = vmul.bf16 %v627, %v711
        %v716 = vmul.bf16 %v628, %v711
        %v717 = vmul.bf16 %v629, %v711
        %v718 = vmul.bf16 %v630, %v711
        %v719 = vmul.bf16 %v631, %v711
        %v720 = vmul.bf16 %v632, %v711
        %v721 = vmul.bf16 %v633, %v711
        %v722 = vmul.bf16 %v634, %v711
        %v723 = vmul.bf16 %v635, %v711
        %v724 = vmul.bf16 %v636, %v711
        %v725 = vmul.bf16 %v637, %v711
        %v726 = vmul.bf16 %v638, %v711
        %v727 = vmul.bf16 %v639, %v711
        %v728 = vmul.bf16 %v640, %v711
        %v729 = vmul.bf16 %v641, %v711
        %v730 = vmul.bf16 %v642, %v711
        %v731 = vmul.bf16 %v643, %v711
        %v732 = vmul.bf16 %v644, %v711
        %v733 = vmul.bf16 %v645, %v711
        %v734 = vmul.bf16 %v646, %v711
        %v735 = vmul.bf16 %v647, %v711
        %v736 = vmul.bf16 %v648, %v711
        %v737 = vunpack.c.l.bf16 %v713
        %v738 = vunpack.c.l.bf16 %v714
        %v739 = vunpack.c.l.bf16 %v715
        %v740 = vunpack.c.l.bf16 %v716
        %v741 = vunpack.c.l.bf16 %v717
        %v742 = vunpack.c.l.bf16 %v718
        %v743 = vunpack.c.l.bf16 %v719
        %v744 = vunpack.c.l.bf16 %v720
        %v745 = vunpack.c.l.bf16 %v721
        %v746 = vunpack.c.l.bf16 %v722
        %v747 = vunpack.c.l.bf16 %v723
        %v748 = vunpack.c.l.bf16 %v724
        %v749 = vunpack.c.l.bf16 %v725
        %v750 = vunpack.c.l.bf16 %v726
        %v751 = vunpack.c.l.bf16 %v727
        %v752 = vunpack.c.l.bf16 %v728
        %v753 = vunpack.c.l.bf16 %v729
        %v754 = vunpack.c.l.bf16 %v730
        %v755 = vunpack.c.l.bf16 %v731
        %v756 = vunpack.c.l.bf16 %v732
        %v757 = vunpack.c.l.bf16 %v733
        %v758 = vunpack.c.l.bf16 %v734
        %v759 = vunpack.c.l.bf16 %v735
        %v760 = vunpack.c.l.bf16 %v736
        %v785 = vrot.slane %v737, 1
        %v786 = vrot.slane %v738, 1
        %v787 = vsel %vm395, %v785, %v786
        %v788 = vrot.slane %v739, 1
        %v789 = vsel %vm395, %v786, %v788
        %v790 = vrot.slane %v740, 1
        %v791 = vrot.slane %v741, 1
        %v792 = vsel %vm395, %v790, %v791
        %v793 = vrot.slane %v742, 1
        %v794 = vsel %vm395, %v791, %v793
        %v795 = vrot.slane %v743, 1
        %v796 = vrot.slane %v744, 1
        %v797 = vsel %vm395, %v795, %v796
        %v798 = vrot.slane %v745, 1
        %v799 = vsel %vm395, %v796, %v798
        %v800 = vrot.slane %v746, 1
        %v801 = vrot.slane %v747, 1
        %v802 = vsel %vm395, %v800, %v801
        %v803 = vrot.slane %v748, 1
        %v804 = vsel %vm395, %v801, %v803
        %v805 = vrot.slane %v749, 1
        %v806 = vrot.slane %v750, 1
        %v807 = vsel %vm395, %v805, %v806
        %v808 = vrot.slane %v751, 1
        %v809 = vsel %vm395, %v806, %v808
        %v810 = vrot.slane %v752, 1
        %v811 = vrot.slane %v753, 1
        %v812 = vsel %vm395, %v810, %v811
        %v813 = vrot.slane %v754, 1
        %v814 = vsel %vm395, %v811, %v813
        %v815 = vrot.slane %v755, 1
        %v816 = vrot.slane %v756, 1
        %v817 = vsel %vm395, %v815, %v816
        %v818 = vrot.slane %v757, 1
        %v819 = vsel %vm395, %v816, %v818
        %v820 = vrot.slane %v758, 1
        %v821 = vrot.slane %v759, 1
        %v822 = vsel %vm395, %v820, %v821
        %v823 = vrot.slane %v760, 1
        %v824 = vsel %vm395, %v821, %v823
        %v841 = vadd.f32 %v689, %v787
        %v842 = vadd.f32 %v690, %v789
        %v843 = vadd.f32 %v691, %v792
        %v844 = vadd.f32 %v692, %v794
        %v845 = vadd.f32 %v693, %v797
        %v846 = vadd.f32 %v694, %v799
        %v847 = vadd.f32 %v695, %v802
        %v848 = vadd.f32 %v696, %v804
        %v849 = vadd.f32 %v697, %v807
        %v850 = vadd.f32 %v698, %v809
        %v851 = vadd.f32 %v699, %v812
        %v852 = vadd.f32 %v700, %v814
        %v853 = vadd.f32 %v701, %v817
        %v854 = vadd.f32 %v702, %v819
        %v855 = vadd.f32 %v703, %v822
        %v856 = vadd.f32 %v704, %v824
        %v857 = vlaneseq
        %v858 = vshrl.u32 %v857, 7
        %v859 = vsub.s32 2, %v858
        %v860 = vrot.slane %v313, %v859
        %v862 = vunpack.c.l.b16 %v860
        %v863 = vpack.c.b16 %v862, %v862
        %v865 = vmul.bf16 %v625, %v863
        %v866 = vmul.bf16 %v626, %v863
        %v867 = vmul.bf16 %v627, %v863
        %v868 = vmul.bf16 %v628, %v863
        %v869 = vmul.bf16 %v629, %v863
        %v870 = vmul.bf16 %v630, %v863
        %v871 = vmul.bf16 %v631, %v863
        %v872 = vmul.bf16 %v632, %v863
        %v873 = vmul.bf16 %v633, %v863
        %v874 = vmul.bf16 %v634, %v863
        %v875 = vmul.bf16 %v635, %v863
        %v876 = vmul.bf16 %v636, %v863
        %v877 = vmul.bf16 %v637, %v863
        %v878 = vmul.bf16 %v638, %v863
        %v879 = vmul.bf16 %v639, %v863
        %v880 = vmul.bf16 %v640, %v863
        %v881 = vmul.bf16 %v641, %v863
        %v882 = vmul.bf16 %v642, %v863
        %v883 = vmul.bf16 %v643, %v863
        %v884 = vmul.bf16 %v644, %v863
        %v885 = vmul.bf16 %v645, %v863
        %v886 = vmul.bf16 %v646, %v863
        %v887 = vmul.bf16 %v647, %v863
        %v888 = vmul.bf16 %v648, %v863
        %v889 = vunpack.c.l.bf16 %v865
        %v890 = vunpack.c.l.bf16 %v866
        %v891 = vunpack.c.l.bf16 %v867
        %v892 = vunpack.c.l.bf16 %v868
        %v893 = vunpack.c.l.bf16 %v869
        %v894 = vunpack.c.l.bf16 %v870
        %v895 = vunpack.c.l.bf16 %v871
        %v896 = vunpack.c.l.bf16 %v872
        %v897 = vunpack.c.l.bf16 %v873
        %v898 = vunpack.c.l.bf16 %v874
        %v899 = vunpack.c.l.bf16 %v875
        %v900 = vunpack.c.l.bf16 %v876
        %v901 = vunpack.c.l.bf16 %v877
        %v902 = vunpack.c.l.bf16 %v878
        %v903 = vunpack.c.l.bf16 %v879
        %v904 = vunpack.c.l.bf16 %v880
        %v905 = vunpack.c.l.bf16 %v881
        %v906 = vunpack.c.l.bf16 %v882
        %v907 = vunpack.c.l.bf16 %v883
        %v908 = vunpack.c.l.bf16 %v884
        %v909 = vunpack.c.l.bf16 %v885
        %v910 = vunpack.c.l.bf16 %v886
        %v911 = vunpack.c.l.bf16 %v887
        %v912 = vunpack.c.l.bf16 %v888
        %v937 = vrot.slane %v889, 2
        %v938 = vrot.slane %v890, 2
        %v939 = vsel %vm548, %v937, %v938
        %v940 = vrot.slane %v891, 2
        %v941 = vsel %vm548, %v938, %v940
        %v942 = vrot.slane %v892, 2
        %v943 = vrot.slane %v893, 2
        %v944 = vsel %vm548, %v942, %v943
        %v945 = vrot.slane %v894, 2
        %v946 = vsel %vm548, %v943, %v945
        %v947 = vrot.slane %v895, 2
        %v948 = vrot.slane %v896, 2
        %v949 = vsel %vm548, %v947, %v948
        %v950 = vrot.slane %v897, 2
        %v951 = vsel %vm548, %v948, %v950
        %v952 = vrot.slane %v898, 2
        %v953 = vrot.slane %v899, 2
        %v954 = vsel %vm548, %v952, %v953
        %v955 = vrot.slane %v900, 2
        %v956 = vsel %vm548, %v953, %v955
        %v957 = vrot.slane %v901, 2
        %v958 = vrot.slane %v902, 2
        %v959 = vsel %vm548, %v957, %v958
        %v960 = vrot.slane %v903, 2
        %v961 = vsel %vm548, %v958, %v960
        %v962 = vrot.slane %v904, 2
        %v963 = vrot.slane %v905, 2
        %v964 = vsel %vm548, %v962, %v963
        %v965 = vrot.slane %v906, 2
        %v966 = vsel %vm548, %v963, %v965
        %v967 = vrot.slane %v907, 2
        %v968 = vrot.slane %v908, 2
        %v969 = vsel %vm548, %v967, %v968
        %v970 = vrot.slane %v909, 2
        %v971 = vsel %vm548, %v968, %v970
        %v972 = vrot.slane %v910, 2
        %v973 = vrot.slane %v911, 2
        %v974 = vsel %vm548, %v972, %v973
        %v975 = vrot.slane %v912, 2
        %v976 = vsel %vm548, %v973, %v975
        %v993 = vadd.f32 %v841, %v939
        %v994 = vadd.f32 %v842, %v941
        %v995 = vadd.f32 %v843, %v944
        %v996 = vadd.f32 %v844, %v946
        %v997 = vadd.f32 %v845, %v949
        %v998 = vadd.f32 %v846, %v951
        %v999 = vadd.f32 %v847, %v954
        %v1000 = vadd.f32 %v848, %v956
        %v1001 = vadd.f32 %v849, %v959
        %v1002 = vadd.f32 %v850, %v961
        %v1003 = vadd.f32 %v851, %v964
        %v1004 = vadd.f32 %v852, %v966
        %v1005 = vadd.f32 %v853, %v969
        %v1006 = vadd.f32 %v854, %v971
        %v1007 = vadd.f32 %v855, %v974
        %v1008 = vadd.f32 %v856, %v976
        %s1009 = sadd.s32 %s239, 2
        %s1010 = smul.u32 %s1009, 3
        %s1011 = smul.addr %s1010, 4
        %s1012 = scalar_lea.vmem %s236, %s1011
        %v1013 = vld [vmem:[%s1012] sm:$0xf]
        %v1014 = vld [vmem:[%s1012 + $0x4] sm:$0xf]
        %v1015 = vld [vmem:[%s1012 + $0x8] sm:$0xf]
        %v1016 = vld [vmem:[%s1012 + $0xc] sm:$0xf]
        %v1017 = vld [vmem:[%s1012 + $0x10] sm:$0xf]
        %v1018 = vld [vmem:[%s1012 + $0x14] sm:$0xf]
        %v1019 = vld [vmem:[%s1012 + $0x18] sm:$0xf]
        %v1020 = vld [vmem:[%s1012 + $0x1c] sm:$0xf]
        %v1021 = vld [vmem:[%s1012 + $0x20] sm:$0xf]
        %v1022 = vld [vmem:[%s1012 + $0x24] sm:$0xf]
        %v1023 = vld [vmem:[%s1012 + $0x28] sm:$0xf]
        %v1024 = vld [vmem:[%s1012 + $0x2c] sm:$0xf]
        %v1025 = vld [vmem:[%s1012 + $0x30] sm:$0xf]
        %v1026 = vld [vmem:[%s1012 + $0x34] sm:$0xf]
        %v1027 = vld [vmem:[%s1012 + $0x38] sm:$0xf]
        %v1028 = vld [vmem:[%s1012 + $0x3c] sm:$0xf]
        %v1029 = vld [vmem:[%s1012 + $0x40] sm:$0xf]
        %v1030 = vld [vmem:[%s1012 + $0x44] sm:$0xf]
        %v1031 = vld [vmem:[%s1012 + $0x48] sm:$0xf]
        %v1032 = vld [vmem:[%s1012 + $0x4c] sm:$0xf]
        %v1033 = vld [vmem:[%s1012 + $0x50] sm:$0xf]
        %v1034 = vld [vmem:[%s1012 + $0x54] sm:$0xf]
        %v1035 = vld [vmem:[%s1012 + $0x58] sm:$0xf]
        %v1036 = vld [vmem:[%s1012 + $0x5c] sm:$0xf]
        %v1037 = vlaneseq
        %v1038 = vshrl.u32 %v1037, 7
        %v1039 = vsub.s32 3, %v1038
        %v1040 = vrot.slane %v270, %v1039
        %v1042 = vunpack.c.l.b16 %v1040
        %v1043 = vpack.c.b16 %v1042, %v1042
        %v1045 = vmul.bf16 %v1013, %v1043
        %v1046 = vmul.bf16 %v1014, %v1043
        %v1047 = vmul.bf16 %v1016, %v1043
        %v1048 = vmul.bf16 %v1017, %v1043
        %v1049 = vmul.bf16 %v1019, %v1043
        %v1050 = vmul.bf16 %v1020, %v1043
        %v1051 = vmul.bf16 %v1022, %v1043
        %v1052 = vmul.bf16 %v1023, %v1043
        %v1053 = vmul.bf16 %v1025, %v1043
        %v1054 = vmul.bf16 %v1026, %v1043
        %v1055 = vmul.bf16 %v1028, %v1043
        %v1056 = vmul.bf16 %v1029, %v1043
        %v1057 = vmul.bf16 %v1031, %v1043
        %v1058 = vmul.bf16 %v1032, %v1043
        %v1059 = vmul.bf16 %v1034, %v1043
        %v1060 = vmul.bf16 %v1035, %v1043
        %v1061 = vunpack.c.l.bf16 %v1045
        %v1062 = vunpack.c.l.bf16 %v1046
        %v1063 = vunpack.c.l.bf16 %v1047
        %v1064 = vunpack.c.l.bf16 %v1048
        %v1065 = vunpack.c.l.bf16 %v1049
        %v1066 = vunpack.c.l.bf16 %v1050
        %v1067 = vunpack.c.l.bf16 %v1051
        %v1068 = vunpack.c.l.bf16 %v1052
        %v1069 = vunpack.c.l.bf16 %v1053
        %v1070 = vunpack.c.l.bf16 %v1054
        %v1071 = vunpack.c.l.bf16 %v1055
        %v1072 = vunpack.c.l.bf16 %v1056
        %v1073 = vunpack.c.l.bf16 %v1057
        %v1074 = vunpack.c.l.bf16 %v1058
        %v1075 = vunpack.c.l.bf16 %v1059
        %v1076 = vunpack.c.l.bf16 %v1060
        %v1077 = vadd.f32 %v993, %v1061
        %v1078 = vadd.f32 %v994, %v1062
        %v1079 = vadd.f32 %v995, %v1063
        %v1080 = vadd.f32 %v996, %v1064
        %v1081 = vadd.f32 %v997, %v1065
        %v1082 = vadd.f32 %v998, %v1066
        %v1083 = vadd.f32 %v999, %v1067
        %v1084 = vadd.f32 %v1000, %v1068
        %v1085 = vadd.f32 %v1001, %v1069
        %v1086 = vadd.f32 %v1002, %v1070
        %v1087 = vadd.f32 %v1003, %v1071
        %v1088 = vadd.f32 %v1004, %v1072
        %v1089 = vadd.f32 %v1005, %v1073
        %v1090 = vadd.f32 %v1006, %v1074
        %v1091 = vadd.f32 %v1007, %v1075
        %v1092 = vadd.f32 %v1008, %v1076
        %v1093 = vlaneseq
        %v1094 = vshrl.u32 %v1093, 7
        %v1095 = vsub.s32 3, %v1094
        %v1096 = vrot.slane %v313, %v1095
        %v1098 = vunpack.c.l.b16 %v1096
        %v1099 = vpack.c.b16 %v1098, %v1098
        %v1101 = vmul.bf16 %v1013, %v1099
        %v1102 = vmul.bf16 %v1014, %v1099
        %v1103 = vmul.bf16 %v1015, %v1099
        %v1104 = vmul.bf16 %v1016, %v1099
        %v1105 = vmul.bf16 %v1017, %v1099
        %v1106 = vmul.bf16 %v1018, %v1099
        %v1107 = vmul.bf16 %v1019, %v1099
        %v1108 = vmul.bf16 %v1020, %v1099
        %v1109 = vmul.bf16 %v1021, %v1099
        %v1110 = vmul.bf16 %v1022, %v1099
        %v1111 = vmul.bf16 %v1023, %v1099
        %v1112 = vmul.bf16 %v1024, %v1099
        %v1113 = vmul.bf16 %v1025, %v1099
        %v1114 = vmul.bf16 %v1026, %v1099
        %v1115 = vmul.bf16 %v1027, %v1099
        %v1116 = vmul.bf16 %v1028, %v1099
        %v1117 = vmul.bf16 %v1029, %v1099
        %v1118 = vmul.bf16 %v1030, %v1099
        %v1119 = vmul.bf16 %v1031, %v1099
        %v1120 = vmul.bf16 %v1032, %v1099
        %v1121 = vmul.bf16 %v1033, %v1099
        %v1122 = vmul.bf16 %v1034, %v1099
        %v1123 = vmul.bf16 %v1035, %v1099
        %v1124 = vmul.bf16 %v1036, %v1099
        %v1125 = vunpack.c.l.bf16 %v1101
        %v1126 = vunpack.c.l.bf16 %v1102
        %v1127 = vunpack.c.l.bf16 %v1103
        %v1128 = vunpack.c.l.bf16 %v1104
        %v1129 = vunpack.c.l.bf16 %v1105
        %v1130 = vunpack.c.l.bf16 %v1106
        %v1131 = vunpack.c.l.bf16 %v1107
        %v1132 = vunpack.c.l.bf16 %v1108
        %v1133 = vunpack.c.l.bf16 %v1109
        %v1134 = vunpack.c.l.bf16 %v1110
        %v1135 = vunpack.c.l.bf16 %v1111
        %v1136 = vunpack.c.l.bf16 %v1112
        %v1137 = vunpack.c.l.bf16 %v1113
        %v1138 = vunpack.c.l.bf16 %v1114
        %v1139 = vunpack.c.l.bf16 %v1115
        %v1140 = vunpack.c.l.bf16 %v1116
        %v1141 = vunpack.c.l.bf16 %v1117
        %v1142 = vunpack.c.l.bf16 %v1118
        %v1143 = vunpack.c.l.bf16 %v1119
        %v1144 = vunpack.c.l.bf16 %v1120
        %v1145 = vunpack.c.l.bf16 %v1121
        %v1146 = vunpack.c.l.bf16 %v1122
        %v1147 = vunpack.c.l.bf16 %v1123
        %v1148 = vunpack.c.l.bf16 %v1124
        %v1173 = vrot.slane %v1125, 1
        %v1174 = vrot.slane %v1126, 1
        %v1175 = vsel %vm395, %v1173, %v1174
        %v1176 = vrot.slane %v1127, 1
        %v1177 = vsel %vm395, %v1174, %v1176
        %v1178 = vrot.slane %v1128, 1
        %v1179 = vrot.slane %v1129, 1
        %v1180 = vsel %vm395, %v1178, %v1179
        %v1181 = vrot.slane %v1130, 1
        %v1182 = vsel %vm395, %v1179, %v1181
        %v1183 = vrot.slane %v1131, 1
        %v1184 = vrot.slane %v1132, 1
        %v1185 = vsel %vm395, %v1183, %v1184
        %v1186 = vrot.slane %v1133, 1
        %v1187 = vsel %vm395, %v1184, %v1186
        %v1188 = vrot.slane %v1134, 1
        %v1189 = vrot.slane %v1135, 1
        %v1190 = vsel %vm395, %v1188, %v1189
        %v1191 = vrot.slane %v1136, 1
        %v1192 = vsel %vm395, %v1189, %v1191
        %v1193 = vrot.slane %v1137, 1
        %v1194 = vrot.slane %v1138, 1
        %v1195 = vsel %vm395, %v1193, %v1194
        %v1196 = vrot.slane %v1139, 1
        %v1197 = vsel %vm395, %v1194, %v1196
        %v1198 = vrot.slane %v1140, 1
        %v1199 = vrot.slane %v1141, 1
        %v1200 = vsel %vm395, %v1198, %v1199
        %v1201 = vrot.slane %v1142, 1
        %v1202 = vsel %vm395, %v1199, %v1201
        %v1203 = vrot.slane %v1143, 1
        %v1204 = vrot.slane %v1144, 1
        %v1205 = vsel %vm395, %v1203, %v1204
        %v1206 = vrot.slane %v1145, 1
        %v1207 = vsel %vm395, %v1204, %v1206
        %v1208 = vrot.slane %v1146, 1
        %v1209 = vrot.slane %v1147, 1
        %v1210 = vsel %vm395, %v1208, %v1209
        %v1211 = vrot.slane %v1148, 1
        %v1212 = vsel %vm395, %v1209, %v1211
        %v1229 = vadd.f32 %v1077, %v1175
        %v1230 = vadd.f32 %v1078, %v1177
        %v1231 = vadd.f32 %v1079, %v1180
        %v1232 = vadd.f32 %v1080, %v1182
        %v1233 = vadd.f32 %v1081, %v1185
        %v1234 = vadd.f32 %v1082, %v1187
        %v1235 = vadd.f32 %v1083, %v1190
        %v1236 = vadd.f32 %v1084, %v1192
        %v1237 = vadd.f32 %v1085, %v1195
        %v1238 = vadd.f32 %v1086, %v1197
        %v1239 = vadd.f32 %v1087, %v1200
        %v1240 = vadd.f32 %v1088, %v1202
        %v1241 = vadd.f32 %v1089, %v1205
        %v1242 = vadd.f32 %v1090, %v1207
        %v1243 = vadd.f32 %v1091, %v1210
        %v1244 = vadd.f32 %v1092, %v1212
        %v1246 = vpack.i.b16 %v241, %v241
        %v1248 = vlaneseq
        %v1249 = vshrl.u32 %v1248, 7
        %v1250 = vsub.s32 0, %v1249
        %v1251 = vrot.slane %v1246, %v1250
        %v1253 = vunpack.c.l.b16 %v1251
        %v1254 = vpack.c.b16 %v1253, %v1253
        %v1256 = vmul.bf16 %v1013, %v1254
        %v1257 = vmul.bf16 %v1014, %v1254
        %v1258 = vmul.bf16 %v1015, %v1254
        %v1259 = vmul.bf16 %v1016, %v1254
        %v1260 = vmul.bf16 %v1017, %v1254
        %v1261 = vmul.bf16 %v1018, %v1254
        %v1262 = vmul.bf16 %v1019, %v1254
        %v1263 = vmul.bf16 %v1020, %v1254
        %v1264 = vmul.bf16 %v1021, %v1254
        %v1265 = vmul.bf16 %v1022, %v1254
        %v1266 = vmul.bf16 %v1023, %v1254
        %v1267 = vmul.bf16 %v1024, %v1254
        %v1268 = vmul.bf16 %v1025, %v1254
        %v1269 = vmul.bf16 %v1026, %v1254
        %v1270 = vmul.bf16 %v1027, %v1254
        %v1271 = vmul.bf16 %v1028, %v1254
        %v1272 = vmul.bf16 %v1029, %v1254
        %v1273 = vmul.bf16 %v1030, %v1254
        %v1274 = vmul.bf16 %v1031, %v1254
        %v1275 = vmul.bf16 %v1032, %v1254
        %v1276 = vmul.bf16 %v1033, %v1254
        %v1277 = vmul.bf16 %v1034, %v1254
        %v1278 = vmul.bf16 %v1035, %v1254
        %v1279 = vmul.bf16 %v1036, %v1254
        %v1280 = vunpack.c.l.bf16 %v1256
        %v1281 = vunpack.c.l.bf16 %v1257
        %v1282 = vunpack.c.l.bf16 %v1258
        %v1283 = vunpack.c.l.bf16 %v1259
        %v1284 = vunpack.c.l.bf16 %v1260
        %v1285 = vunpack.c.l.bf16 %v1261
        %v1286 = vunpack.c.l.bf16 %v1262
        %v1287 = vunpack.c.l.bf16 %v1263
        %v1288 = vunpack.c.l.bf16 %v1264
        %v1289 = vunpack.c.l.bf16 %v1265
        %v1290 = vunpack.c.l.bf16 %v1266
        %v1291 = vunpack.c.l.bf16 %v1267
        %v1292 = vunpack.c.l.bf16 %v1268
        %v1293 = vunpack.c.l.bf16 %v1269
        %v1294 = vunpack.c.l.bf16 %v1270
        %v1295 = vunpack.c.l.bf16 %v1271
        %v1296 = vunpack.c.l.bf16 %v1272
        %v1297 = vunpack.c.l.bf16 %v1273
        %v1298 = vunpack.c.l.bf16 %v1274
        %v1299 = vunpack.c.l.bf16 %v1275
        %v1300 = vunpack.c.l.bf16 %v1276
        %v1301 = vunpack.c.l.bf16 %v1277
        %v1302 = vunpack.c.l.bf16 %v1278
        %v1303 = vunpack.c.l.bf16 %v1279
        %v1328 = vrot.slane %v1280, 2
        %v1329 = vrot.slane %v1281, 2
        %v1330 = vsel %vm548, %v1328, %v1329
        %v1331 = vrot.slane %v1282, 2
        %v1332 = vsel %vm548, %v1329, %v1331
        %v1333 = vrot.slane %v1283, 2
        %v1334 = vrot.slane %v1284, 2
        %v1335 = vsel %vm548, %v1333, %v1334
        %v1336 = vrot.slane %v1285, 2
        %v1337 = vsel %vm548, %v1334, %v1336
        %v1338 = vrot.slane %v1286, 2
        %v1339 = vrot.slane %v1287, 2
        %v1340 = vsel %vm548, %v1338, %v1339
        %v1341 = vrot.slane %v1288, 2
        %v1342 = vsel %vm548, %v1339, %v1341
        %v1343 = vrot.slane %v1289, 2
        %v1344 = vrot.slane %v1290, 2
        %v1345 = vsel %vm548, %v1343, %v1344
        %v1346 = vrot.slane %v1291, 2
        %v1347 = vsel %vm548, %v1344, %v1346
        %v1348 = vrot.slane %v1292, 2
        %v1349 = vrot.slane %v1293, 2
        %v1350 = vsel %vm548, %v1348, %v1349
        %v1351 = vrot.slane %v1294, 2
        %v1352 = vsel %vm548, %v1349, %v1351
        %v1353 = vrot.slane %v1295, 2
        %v1354 = vrot.slane %v1296, 2
        %v1355 = vsel %vm548, %v1353, %v1354
        %v1356 = vrot.slane %v1297, 2
        %v1357 = vsel %vm548, %v1354, %v1356
        %v1358 = vrot.slane %v1298, 2
        %v1359 = vrot.slane %v1299, 2
        %v1360 = vsel %vm548, %v1358, %v1359
        %v1361 = vrot.slane %v1300, 2
        %v1362 = vsel %vm548, %v1359, %v1361
        %v1363 = vrot.slane %v1301, 2
        %v1364 = vrot.slane %v1302, 2
        %v1365 = vsel %vm548, %v1363, %v1364
        %v1366 = vrot.slane %v1303, 2
        %v1367 = vsel %vm548, %v1364, %v1366
        %v1384 = vadd.f32 %v1229, %v1330
        %v1385 = vadd.f32 %v1230, %v1332
        %v1386 = vadd.f32 %v1231, %v1335
        %v1387 = vadd.f32 %v1232, %v1337
        %v1388 = vadd.f32 %v1233, %v1340
        %v1389 = vadd.f32 %v1234, %v1342
        %v1390 = vadd.f32 %v1235, %v1345
        %v1391 = vadd.f32 %v1236, %v1347
        %v1392 = vadd.f32 %v1237, %v1350
        %v1393 = vadd.f32 %v1238, %v1352
        %v1394 = vadd.f32 %v1239, %v1355
        %v1395 = vadd.f32 %v1240, %v1357
        %v1396 = vadd.f32 %v1241, %v1360
        %v1397 = vadd.f32 %v1242, %v1362
        %v1398 = vadd.f32 %v1243, %v1365
        %v1399 = vadd.f32 %v1244, %v1367
        %v1400 = vld [vmem:[%s2] sm:$0x1]
        %v1402 = vlaneseq
        %v1403 = vshrl.u32 %v1402, 7
        %v1404 = vsub.s32 0, %v1403
        %v1405 = vrot.slane %v1400, %v1404
        %v1407 = vadd.f32 %v1384, %v1405
        %v1408 = vadd.f32 %v1385, %v1405
        %v1409 = vadd.f32 %v1386, %v1405
        %v1410 = vadd.f32 %v1387, %v1405
        %v1411 = vadd.f32 %v1388, %v1405
        %v1412 = vadd.f32 %v1389, %v1405
        %v1413 = vadd.f32 %v1390, %v1405
        %v1414 = vadd.f32 %v1391, %v1405
        %v1415 = vadd.f32 %v1392, %v1405
        %v1416 = vadd.f32 %v1393, %v1405
        %v1417 = vadd.f32 %v1394, %v1405
        %v1418 = vadd.f32 %v1395, %v1405
        %v1419 = vadd.f32 %v1396, %v1405
        %v1420 = vadd.f32 %v1397, %v1405
        %v1421 = vadd.f32 %v1398, %v1405
        %v1422 = vadd.f32 %v1399, %v1405
        %v1423 = vmax.f32 %v1407, 0.0
        %v1424 = vmax.f32 %v1408, 0.0
        %v1425 = vmax.f32 %v1409, 0.0
        %v1426 = vmax.f32 %v1410, 0.0
        %v1427 = vmax.f32 %v1411, 0.0
        %v1428 = vmax.f32 %v1412, 0.0
        %v1429 = vmax.f32 %v1413, 0.0
        %v1430 = vmax.f32 %v1414, 0.0
        %v1431 = vmax.f32 %v1415, 0.0
        %v1432 = vmax.f32 %v1416, 0.0
        %v1433 = vmax.f32 %v1417, 0.0
        %v1434 = vmax.f32 %v1418, 0.0
        %v1435 = vmax.f32 %v1419, 0.0
        %v1436 = vmax.f32 %v1420, 0.0
        %v1437 = vmax.f32 %v1421, 0.0
        %v1438 = vmax.f32 %v1422, 0.0
        %v1439 = vpack.c.bf16 %v1424, %v1423
        %v1440 = vpack.c.bf16 %v1426, %v1425
        %v1441 = vpack.c.bf16 %v1428, %v1427
        %v1442 = vpack.c.bf16 %v1430, %v1429
        %v1443 = vpack.c.bf16 %v1432, %v1431
        %v1444 = vpack.c.bf16 %v1434, %v1433
        %v1445 = vpack.c.bf16 %v1436, %v1435
        %v1446 = vpack.c.bf16 %v1438, %v1437
        %v1447 = vld [vmem:[%s3] sm:$0xf]
        %v1448 = vld [vmem:[%s3 + $0x4] sm:$0xf]
        %v1449 = vld [vmem:[%s3 + $0x8] sm:$0xf]
        %v1450 = vld [vmem:[%s3 + $0xc] sm:$0xf]
        %v1451 = vld [vmem:[%s3 + $0x10] sm:$0xf]
        %v1452 = vld [vmem:[%s3 + $0x14] sm:$0xf]
        %v1453 = vld [vmem:[%s3 + $0x18] sm:$0xf]
        %v1454 = vld [vmem:[%s3 + $0x1c] sm:$0xf]
        %v1455 = vld [vmem:[%s4] sm:$0x1]
        %v1457 = vlaneseq
        %v1458 = vshrl.u32 %v1457, 7
        %v1459 = vsub.s32 0, %v1458
        %v1460 = vrot.slane %v1455, %v1459
        %v1470 = vunpack.c.l.b16 %v1447
        %v1471 = vunpack.c.l.b16 %v1448
        %v1472 = vunpack.c.l.b16 %v1449
        %v1473 = vunpack.c.l.b16 %v1450
        %v1474 = vunpack.c.l.b16 %v1451
        %v1475 = vunpack.c.l.b16 %v1452
        %v1476 = vunpack.c.l.b16 %v1453
        %v1477 = vunpack.c.l.b16 %v1454
        %v1478 = vpack.c.b16 %v1471, %v1470
        %v1479 = vpack.c.b16 %v1473, %v1472
        %v1480 = vpack.c.b16 %v1475, %v1474
        %v1481 = vpack.c.b16 %v1477, %v1476
        %vm1486 = vcmask 523264
        %v1488 = vsel %vm1486, %v1439, 0
        %v1491 = vsel %vm1486, %v1440, 0
        %v1494 = vsel %vm1486, %v1441, 0
        %v1497 = vsel %vm1486, %v1442, 0
        %v1500 = vsel %vm1486, %v1443, 0
        %v1503 = vsel %vm1486, %v1444, 0
        %v1506 = vsel %vm1486, %v1445, 0
        %v1509 = vsel %vm1486, %v1446, 0
        %1511 = vmatprep.subr.bf16.mxu0 0
        %1512 = vmatpush1.bf16.msra.mxu0 %v1478
        %1513 = vmatprep.subr.bf16.mxu0 0
        %1514 = vmatpush1.bf16.msra.mxu0 %v1479
        %1515 = vmatprep.subr.bf16.mxu0 0
        %1516 = vmatpush1.bf16.msra.mxu0 %v1480
        %1517 = vmatprep.subr.bf16.mxu0 0
        %1518 = vmatpush1.bf16.msra.mxu0 %v1481
        %1519 = vmatprep.subr.bf16.mxu0 0
        %1520 = vmatpush1.bf16.msra.mxu0 0
        %1521 = vmatprep.subr.bf16.mxu0 0
        %1522 = vmatpush1.bf16.msra.mxu0 0
        %1523 = vmatprep.subr.bf16.mxu0 0
        %1524 = vmatpush1.bf16.msra.mxu0 0
        %1525 = vmatprep.subr.bf16.mxu0 0
        %1526 = vmatpush1.bf16.msra.mxu0 0
        %1527 = vmatprep.subr.bf16.mxu0 0
        %1528 = vmatpush1.bf16.msra.mxu0 0
        %1529 = vmatprep.subr.bf16.mxu0 0
        %1530 = vmatpush1.bf16.msra.mxu0 0
        %1531 = vmatprep.subr.bf16.mxu0 0
        %1532 = vmatpush1.bf16.msra.mxu0 0
        %1533 = vmatprep.subr.bf16.mxu0 0
        %1534 = vmatpush1.bf16.msra.mxu0 0
        %1535 = vmatprep.subr.bf16.mxu0 0
        %1536 = vmatpush1.bf16.msra.mxu0 0
        %1537 = vmatprep.subr.bf16.mxu0 0
        %1538 = vmatpush1.bf16.msra.mxu0 0
        %1539 = vmatprep.subr.bf16.mxu0 0
        %1540 = vmatpush1.bf16.msra.mxu0 0
        %1541 = vmatprep.subr.bf16.mxu0 0
        %1542 = vmatpush1.bf16.msra.mxu0 0
        %1543 = vmatprep.mubr.bf16.mxu0 0
        %1544 = vmatmul.mubr.bf16.gmra.mrb[0].mxu0 %v1488
        %v1545 = vpop.f32.mrb[0].mxu0
        %v1546 = vadd.f32 %v1460, %v1545
        %v1547 = vpop.f32.mrb[0].mxu0
        %v1548 = vpop.f32.mrb[0].mxu0
        %v1549 = vadd.f32 %v1460, %v1548
        %v1550 = vpop.f32.mrb[0].mxu0
        %1551 = vmatprep.mubr.bf16.mxu0 0
        %1552 = vmatmul.mubr.bf16.gmra.mrb[0].mxu0 %v1491
        %v1553 = vpop.f32.mrb[0].mxu0
        %v1554 = vadd.f32 %v1460, %v1553
        %v1555 = vpop.f32.mrb[0].mxu0
        %v1556 = vpop.f32.mrb[0].mxu0
        %v1557 = vadd.f32 %v1460, %v1556
        %v1558 = vpop.f32.mrb[0].mxu0
        %1559 = vmatprep.mubr.bf16.mxu0 0
        %1560 = vmatmul.mubr.bf16.gmra.mrb[0].mxu0 %v1494
        %v1561 = vpop.f32.mrb[0].mxu0
        %v1562 = vadd.f32 %v1460, %v1561
        %v1563 = vpop.f32.mrb[0].mxu0
        %v1564 = vpop.f32.mrb[0].mxu0
        %v1565 = vadd.f32 %v1460, %v1564
        %v1566 = vpop.f32.mrb[0].mxu0
        %1567 = vmatprep.mubr.bf16.mxu0 0
        %1568 = vmatmul.mubr.bf16.gmra.mrb[0].mxu0 %v1497
        %v1569 = vpop.f32.mrb[0].mxu0
        %v1570 = vadd.f32 %v1460, %v1569
        %v1571 = vpop.f32.mrb[0].mxu0
        %v1572 = vpop.f32.mrb[0].mxu0
        %v1573 = vadd.f32 %v1460, %v1572
        %v1574 = vpop.f32.mrb[0].mxu0
        %1575 = vmatprep.mubr.bf16.mxu0 0
        %1576 = vmatmul.mubr.bf16.gmra.mrb[0].mxu0 %v1500
        %v1577 = vpop.f32.mrb[0].mxu0
        %v1578 = vadd.f32 %v1460, %v1577
        %v1579 = vpop.f32.mrb[0].mxu0
        %v1580 = vpop.f32.mrb[0].mxu0
        %v1581 = vadd.f32 %v1460, %v1580
        %v1582 = vpop.f32.mrb[0].mxu0
        %1583 = vmatprep.mubr.bf16.mxu0 0
        %1584 = vmatmul.mubr.bf16.gmra.mrb[0].mxu0 %v1503
        %v1585 = vpop.f32.mrb[0].mxu0
        %v1586 = vadd.f32 %v1460, %v1585
        %v1587 = vpop.f32.mrb[0].mxu0
        %v1588 = vpop.f32.mrb[0].mxu0
        %v1589 = vadd.f32 %v1460, %v1588
        %v1590 = vpop.f32.mrb[0].mxu0
        %1591 = vmatprep.mubr.bf16.mxu0 0
        %1592 = vmatmul.mubr.bf16.gmra.mrb[0].mxu0 %v1506
        %v1593 = vpop.f32.mrb[0].mxu0
        %v1594 = vadd.f32 %v1460, %v1593
        %v1595 = vpop.f32.mrb[0].mxu0
        %v1596 = vpop.f32.mrb[0].mxu0
        %v1597 = vadd.f32 %v1460, %v1596
        %v1598 = vpop.f32.mrb[0].mxu0
        %1599 = vmatprep.mubr.bf16.mxu0 0
        %1600 = vmatmul.mubr.bf16.gmra.mrb[0].mxu0 %v1509
        %v1601 = vpop.f32.mrb[0].mxu0
        %v1602 = vadd.f32 %v1460, %v1601
        %v1603 = vpop.f32.mrb[0].mxu0
        %v1604 = vpop.f32.mrb[0].mxu0
        %v1605 = vadd.f32 %v1460, %v1604
        %v1606 = vpop.f32.mrb[0].mxu0
        %1607 = vdwg.mxu0
        %v1608 = vmax.f32 %v1546, 0.0
        %v1609 = vmax.f32 %v1549, 0.0
        %v1610 = vmax.f32 %v1554, 0.0
        %v1611 = vmax.f32 %v1557, 0.0
        %v1612 = vmax.f32 %v1562, 0.0
        %v1613 = vmax.f32 %v1565, 0.0
        %v1614 = vmax.f32 %v1570, 0.0
        %v1615 = vmax.f32 %v1573, 0.0
        %v1616 = vmax.f32 %v1578, 0.0
        %v1617 = vmax.f32 %v1581, 0.0
        %v1618 = vmax.f32 %v1586, 0.0
        %v1619 = vmax.f32 %v1589, 0.0
        %v1620 = vmax.f32 %v1594, 0.0
        %v1621 = vmax.f32 %v1597, 0.0
        %v1622 = vmax.f32 %v1602, 0.0
        %v1623 = vmax.f32 %v1605, 0.0
        %v1624 = vpack.c.bf16 %v1609, %v1608
        %v1625 = vpack.c.bf16 %v1611, %v1610
        %v1626 = vpack.c.bf16 %v1613, %v1612
        %v1627 = vpack.c.bf16 %v1615, %v1614
        %v1628 = vpack.c.bf16 %v1617, %v1616
        %v1629 = vpack.c.bf16 %v1619, %v1618
        %v1630 = vpack.c.bf16 %v1621, %v1620
        %v1631 = vpack.c.bf16 %v1623, %v1622
        %v1640 = vunpack.c.l.b16 %v1624
        %v1641 = vunpack.c.h.b16 %v1624
        %v1642 = vunpack.c.l.b16 %v1625
        %v1643 = vunpack.c.h.b16 %v1625
        %v1644 = vunpack.c.l.b16 %v1626
        %v1645 = vunpack.c.h.b16 %v1626
        %v1646 = vunpack.c.l.b16 %v1627
        %v1647 = vunpack.c.h.b16 %v1627
        %v1648 = vunpack.c.l.b16 %v1628
        %v1649 = vunpack.c.h.b16 %v1628
        %v1650 = vunpack.c.l.b16 %v1629
        %v1651 = vunpack.c.h.b16 %v1629
        %v1652 = vunpack.c.l.b16 %v1630
        %v1653 = vunpack.c.h.b16 %v1630
        %v1654 = vunpack.c.l.b16 %v1631
        %v1655 = vunpack.c.h.b16 %v1631
        %v1656 = vpack.c.b16 %v1640, %v1640
        %v1657 = vpack.c.b16 %v1641, %v1641
        %v1658 = vpack.c.b16 %v1642, %v1642
        %v1659 = vpack.c.b16 %v1643, %v1643
        %v1660 = vpack.c.b16 %v1644, %v1644
        %v1661 = vpack.c.b16 %v1645, %v1645
        %v1662 = vpack.c.b16 %v1646, %v1646
        %v1663 = vpack.c.b16 %v1647, %v1647
        %v1664 = vpack.c.b16 %v1648, %v1648
        %v1665 = vpack.c.b16 %v1649, %v1649
        %v1666 = vpack.c.b16 %v1650, %v1650
        %v1667 = vpack.c.b16 %v1651, %v1651
        %v1668 = vpack.c.b16 %v1652, %v1652
        %v1669 = vpack.c.b16 %v1653, %v1653
        %v1670 = vpack.c.b16 %v1654, %v1654
        %v1671 = vpack.c.b16 %v1655, %v1655
        %1688 = vst [vmem:[%s231] sm:$0xf] %v1656
        %1689 = vst [vmem:[%s231 + $0x4] sm:$0xf] %v1657
        %1690 = vst [vmem:[%s231 + $0x8] sm:$0xf] %v1658
        %1691 = vst [vmem:[%s231 + $0xc] sm:$0xf] %v1659
        %1692 = vst [vmem:[%s231 + $0x10] sm:$0xf] %v1660
        %1693 = vst [vmem:[%s231 + $0x14] sm:$0xf] %v1661
        %1694 = vst [vmem:[%s231 + $0x18] sm:$0xf] %v1662
        %1695 = vst [vmem:[%s231 + $0x1c] sm:$0xf] %v1663
        %1696 = vst [vmem:[%s231 + $0x20] sm:$0xf] %v1664
        %1697 = vst [vmem:[%s231 + $0x24] sm:$0xf] %v1665
        %1698 = vst [vmem:[%s231 + $0x28] sm:$0xf] %v1666
        %1699 = vst [vmem:[%s231 + $0x2c] sm:$0xf] %v1667
        %1700 = vst [vmem:[%s231 + $0x30] sm:$0xf] %v1668
        %1701 = vst [vmem:[%s231 + $0x34] sm:$0xf] %v1669
        %1702 = vst [vmem:[%s231 + $0x38] sm:$0xf] %v1670
        %1703 = vst [vmem:[%s231 + $0x3c] sm:$0xf] %v1671
        %s1704 = sand.u32 %s151, 1
        %s1705 = scalar_lea.sflag [#allocation3], %s1704
        %s1706 = sand.u32 %s151, 1
        %s1707 = smul.addr %s1706, 64
        %s1708 = scalar_lea.vmem [#allocation2], %s1707
        // Predicated region
        $region41: #{mobilev1_block_forward.1} parent=39 // pred_check
          %p1709 = pneg %p161
        $region42: #{mobilev1_block_forward.1} parent=39 // pred_check_branch
          %1711 = sbr.rel (%p1709) target = $region44
        $region43: #{mobilev1_block_forward.1} parent=39 // pred_region
          %s1712 = smul.u32 16, %s24
          %s1714 = ssub.s32 1024, 1024
          %1715 = vsyncadd %s1705, %s1714
          %s1716 = smul.addr %s23, 32
          %s1717 = sadd.s32 %s1712, %s1716
          %s1718 = smul.addr %s1717, 64
          %s1719 = scalar_lea.hbm %s5, %s1718
          %s1720 = sshll.u32 %s1708, 4
          %s1721 = int_to_ptr.vmem [resolvable:$true] %s1720
          %1726 = dma.vmem_to_hbm [thread:$0]  %s1721, 1024, %s1719, %s1705, 64, 64, 4
        $region44: #{mobilev1_block_forward.1} parent=39 // pred_fallthru
          _
      $region40: #{mobilev1_block_forward.1} parent=5 // pred_fallthru
        _
      %p1727 = scmp.le.s32.totalorder 2, %s14
      // Predicated region
      $region45: #{mobilev1_block_forward.1} parent=5 // pred_check
        %p1728 = pneg %p1727
      $region46: #{mobilev1_block_forward.1} parent=5 // pred_check_branch
        %1730 = sbr.rel (%p1728) target = $region48
      $region47: #{mobilev1_block_forward.1} parent=5 // pred_region
        %s1731 = ssub.s32 %s14, 2
        // Predicated region
        $region49: #{mobilev1_block_forward.1} parent=47 // pred_check
          %p1732 = pneg %p167
        $region50: #{mobilev1_block_forward.1} parent=47 // pred_check_branch
          %1734 = sbr.rel (%p1732) target = $region52
        $region51: #{mobilev1_block_forward.1} parent=47 // pred_region
          %s1735 = sand.u32 %s152, 1
          %s1736 = scalar_lea.sflag [#allocation3], %s1735
          %s1737 = sand.u32 %s152, 1
          %s1738 = smul.addr %s1737, 64
          %s1739 = scalar_lea.vmem [#allocation2], %s1738
          %1740 = dma.done %s1736, 1024
        $region52: #{mobilev1_block_forward.1} parent=47 // pred_fallthru
          _
      $region48: #{mobilev1_block_forward.1} parent=5 // pred_fallthru
        _
    $region6: #{mobilev1_block_forward.1} parent=1 // loop_footer
      %s18 = sadd.s32 1, %s14
    $region7: #{mobilev1_block_forward.1} parent=1 // loop_footer_branch
      %13 = sbr.rel target = $region3
    $region8: #{mobilev1_block_forward.1} parent=1 // loop_exit
      _
    %1741 = vsyncpa [#allocation3], 1
    %s1742 = scalar_lea.sflag [#allocation3], 1
    %1743 = vsyncpa %s1742, 1

</llo_original>
